<compile_context>
chip_gen: v7x
topology: tpu7x:2x2x1
jax: 0.10.0
libtpu: 0.0.40
codegen_flags: <defaults>
</compile_context>

<pallas_src>
import jax
import jax.numpy as jnp
from jax import lax
from jax.experimental import pallas as pl
from jax.experimental.pallas import tpu as pltpu


C_FEAT = 960    # MobileViTv3-S final feature channels (fixed by W's shape)
N_OUT = 4       # projection width of W
_SUB_ROWS = 16  # in-kernel batch sub-chunk: bounds vreg pressure of pooled tile


def _round_up(x, m):
    return -(-x // m) * m


def _encoder_head_kernel(x_ref, wt_ref, o_ref):
    """Fused global-average-pool + projection for one batch block.

    x_ref  : (TB, C, HW) feature block — channels on sublanes, spatial on lanes.
    wt_ref : (N_OUT, C)  projection matrix, pre-transposed (lane-dense in C).
    o_ref  : (TB, N_OUT) float32 output block for this batch block.
    """
    tb = x_ref.shape[0]
    inv_hw = 1.0 / x_ref.shape[-1]                  # static at trace time
    wt = wt_ref[...].astype(jnp.float32)            # (N_OUT, C), tiny

    # Process the batch block in small sub-chunks so the pooled (rows, C)
    # f32 intermediate never approaches the vreg-file size (avoids spills on
    # v7x where compute slack under the HBM stream is thin).
    start = 0
    while start < tb:                               # static Python loop
        rows = min(_SUB_ROWS, tb - start)
        xs = x_ref[pl.ds(start, rows), :, :].astype(jnp.float32)
        # Global average pool over the spatial (lane) axis -> (rows, C).
        pooled = jnp.sum(xs, axis=-1) * inv_hw
        # (rows, C) x (N_OUT, C)^T on the MXU, contracting the lane dims.
        out = lax.dot_general(
            pooled, wt,
            dimension_numbers=(((1,), (1,)), ((), ())),
            preferred_element_type=jnp.float32)
        o_ref[pl.ds(start, rows), :] = out.astype(o_ref.dtype)
        start += rows


def _vmem_capacity_bytes():
    """Per-core VMEM capacity; conservative (v7x = 64 MiB) fallback."""
    try:
        cap = int(getattr(pltpu.get_tpu_info(), "vmem_capacity_bytes", 0))
        if cap > 0:
            return cap
    except Exception:
        pass
    return 64 * 1024 * 1024


def _choose_batch_block(b, c, hw, itemsize, vmem_capacity):
    """Largest batch block whose *lane-padded*, double-buffered input tile
    stays within half of VMEM, preferring multiple-of-8 divisors of b and
    (for b >= 16) at least two grid steps so v7x can split across cores."""
    c_pad = _round_up(c, 16)            # sublane padding (covers f32 & bf16 packing)
    hw_pad = _round_up(hw, 128)         # lane padding
    per_row = c_pad * hw_pad * itemsize
    budget = vmem_capacity // 4         # tile budget; 2 buffers -> half of VMEM
    cap = max(1, budget // per_row)
    if b >= 16:
        cap = min(cap, b // 2)          # guarantee >= 2 "parallel" grid steps
    divs8 = [d for d in range(8, b + 1, 8) if b % d == 0]
    fitting = [d for d in divs8 if d <= cap]
    if fitting:
        return max(fitting)
    if b <= cap:
        return b                        # small batch (< 8, or no mult-of-8 divisor)
    if divs8:
        return min(divs8)               # over budget: smallest tiling-legal block
    # TODO(synk): pathological case (huge feature map with batch not a multiple
    # of 8) would need batch padding or a spatial grid axis; take the whole batch.
    return b


def encoder_head(features_nchw: jax.Array, w: jax.Array) -> jax.Array:
    """features_nchw: [B, C, Hf, Wf] (f32 or bf16), w: [C, N_OUT] -> [B, N_OUT] f32."""
    b, c, h, wdt = features_nchw.shape
    assert c == w.shape[0]
    n_out = w.shape[1]
    hw = h * wdt

    # Free reshape (no transpose / extra HBM traffic): NCHW -> [B, C, HW].
    x = features_nchw.reshape(b, c, hw)
    # Tiny wrapper-side transpose: W (C, N_OUT) -> (N_OUT, C), lane-dense.
    wt = jnp.transpose(w)

    itemsize = x.dtype.itemsize
    vmem_cap = _vmem_capacity_bytes()
    tb = _choose_batch_block(b, c, hw, itemsize, vmem_cap)
    grid = (b // tb,)

    # Scoped-VMEM limit covering the real (padded, double-buffered) allocation,
    # so v5e's smaller default never trips and larger tiles are allowed.
    c_pad, hw_pad = _round_up(c, 16), _round_up(hw, 128)
    tile_bytes = tb * c_pad * hw_pad * itemsize
    wt_bytes = _round_up(n_out, 8) * _round_up(c, 128) * wt.dtype.itemsize
    out_bytes = _round_up(tb, 8) * _round_up(n_out, 128) * 4
    needed = 2 * (tile_bytes + wt_bytes + out_bytes)
    vmem_limit = int(min(vmem_cap - (4 << 20),
                         max(needed + (4 << 20), 32 << 20)))

    cost = pl.CostEstimate(
        flops=b * c * hw + 2 * b * c * n_out,        # pool adds + projection MACs
        transcendentals=0,
        bytes_accessed=(b * c * hw * itemsize
                        + n_out * c * wt.dtype.itemsize
                        + b * n_out * 4),
    )

    return pl.pallas_call(
        _encoder_head_kernel,
        out_shape=jax.ShapeDtypeStruct((b, n_out), jnp.float32),
        grid_spec=pltpu.PrefetchScalarGridSpec(
            num_scalar_prefetch=0,
            grid=grid,
            in_specs=[
                pl.BlockSpec((tb, c, hw), lambda i: (i, 0, 0)),
                pl.BlockSpec((n_out, c), lambda i: (0, 0)),
            ],
            # Per-batch-block output, so the batch axis stays megacore-splittable.
            out_specs=pl.BlockSpec((tb, n_out), lambda i: (i, 0)),
        ),
        compiler_params=pltpu.CompilerParams(
            dimension_semantics=("parallel",),
            vmem_limit_bytes=vmem_limit),
        cost_estimate=cost,
    )(x, wt)


def init_params(key):
    # nn.init.xavier_normal_(W, gain=1): std = gain * sqrt(2 / (fan_in + fan_out))
    std = (2.0 / (C_FEAT + N_OUT)) ** 0.5
    w = std * jax.random.normal(key, (C_FEAT, N_OUT), dtype=jnp.float32)
    return w


if __name__ == "__main__":
    key = jax.random.PRNGKey(0)
    k_feat, k_w = jax.random.split(key)

    # Synthetic backbone output (stand-in for the MobileViT trunk features):
    # small spatial map, 960 channels as required by W.
    B, Hf, Wf = 2, 8, 8
    features = jax.random.normal(k_feat, (B, C_FEAT, Hf, Wf), dtype=jnp.float32)
    w = init_params(k_w)

    head = jax.jit(encoder_head)
    out = jax.block_until_ready(head(features, w))

    # Reference check (plain JAX): global avg pool -> squeeze -> matmul.
    ref = jnp.mean(features, axis=(2, 3)) @ w
    assert out.shape == (B, N_OUT)
    assert jnp.allclose(out, ref, atol=1e-4, rtol=1e-4), "mismatch vs reference"

    print("KERNEL_OK")
</pallas_src>

<mosaic_0001>
module attributes {stable_mosaic.version = 11 : i64} {
  func.func @_encoder_head_kernel(%arg0: i32, %arg1: memref<2x960x64xf32, #tpu.memory_space<vmem>>, %arg2: memref<4x960xf32, #tpu.memory_space<vmem>>, %arg3: memref<2x4xf32, #tpu.memory_space<vmem>>) attributes {dimension_semantics = [#tpu.dimension_semantics<parallel>], iteration_bounds = array<i64: 1>, scalar_prefetch = 0 : i64, scratch_operands = 0 : i64, tpu.core_type = #tpu.core_type<tc>, window_params = [{transform_indices = @transform_0, window_bounds = array<i64: 2, 960, 64>}, {pipeline_mode = #tpu.pipeline_mode<synchronous>, transform_indices = @transform_1, window_bounds = array<i64: 4, 960>}, {transform_indices = @transform_2, window_bounds = array<i64: 2, 4>}]} {
    %c0 = arith.constant 0 : index
    %c0_0 = arith.constant 0 : index
    %0 = vector.load %arg2[%c0, %c0_0] : memref<4x960xf32, #tpu.memory_space<vmem>>, vector<4x960xf32>
    %c0_1 = arith.constant 0 : index
    %c0_2 = arith.constant 0 : index
    %c0_3 = arith.constant 0 : index
    %1 = vector.load %arg1[%c0_1, %c0_2, %c0_3] : memref<2x960x64xf32, #tpu.memory_space<vmem>>, vector<2x960x64xf32>
    %cst = arith.constant dense<0.000000e+00> : vector<2x960xf32>
    %2 = vector.multi_reduction <add>, %1, %cst [2] : vector<2x960x64xf32> to vector<2x960xf32>
    %cst_4 = arith.constant 1.562500e-02 : f32
    %3 = vector.broadcast %cst_4 : f32 to vector<2x960xf32>
    %4 = arith.mulf %2, %3 : vector<2x960xf32>
    %cst_5 = arith.constant dense<0.000000e+00> : vector<2x4xf32>
    %5 = tpu.matmul %4, %0, %cst_5 {dimension_numbers = #tpu.dot_dimension_numbers<[1], [1], [0], [0], [0, 0, 1, 0], [], []>} : vector<2x960xf32>, vector<4x960xf32>, vector<2x4xf32> -> vector<2x4xf32>
    %c0_6 = arith.constant 0 : index
    %c0_7 = arith.constant 0 : index
    %6 = vector.load %arg3[%c0_6, %c0_7] : memref<2x4xf32, #tpu.memory_space<vmem>>, vector<2x4xf32>
    tpu.vector_store %arg3[%c0_6, %c0_7], %5 {strides = array<i32>} : memref<2x4xf32, #tpu.memory_space<vmem>>, vector<2x4xf32>,
    return
  }
  func.func @transform_0(%arg0: i32) -> (i32, i32, i32) {
    %c0_i32 = arith.constant 0 : i32
    %c0_i32_0 = arith.constant 0 : i32
    %c0_i32_1 = arith.constant 0 : i32
    return %arg0, %c0_i32, %c0_i32_0 : i32, i32, i32
  }
  func.func @transform_1(%arg0: i32) -> (i32, i32) {
    %c0_i32 = arith.constant 0 : i32
    %c0_i32_0 = arith.constant 0 : i32
    %c0_i32_1 = arith.constant 0 : i32
    return %c0_i32, %c0_i32_0 : i32, i32
  }
  func.func @transform_2(%arg0: i32) -> (i32, i32) {
    %c0_i32 = arith.constant 0 : i32
    %c0_i32_0 = arith.constant 0 : i32
    return %arg0, %c0_i32 : i32, i32
  }
}

</mosaic_0001>

<llo_original>
// kernel: encoder_head.1
$region0: #{encoder_head.1}
  #allocation0 [shape = 'u32[]', space=smem, size = 0x4, offset = 0x4, fixed_abs, tag = 'smem constant byte address 0x4 - core index']
  #allocation1 [shape = 'u32[144,128]{1,0:T(1,128)}', space=vmem, size = 0x12000, scoped, tag = 'internal scratch']
  %s0 = inlined_call_operand.vmem [shape: f32[2,960,64], index: 0, kind: input, shape index: {}]
  %s1 = inlined_call_operand.vmem [shape: f32[4,960], index: 1, kind: input, shape index: {}]
  %s2 = inlined_call_operand.hbm [shape: f32[2,4], index: 2, kind: output, shape index: {}]
  %s3 = sld [smem:[#allocation0]]
  $region18: #{encoder_head.1} parent=0
    _
  %s5 = ssub.s32 1, %s3
  %s6 = scalar_select 0, %s5, %s3
  $region1: #{encoder_head.1} parent=0
    #allocation2 [shape = 'u8[1024]{0}', space=vmem, size = 0x400, scoped, tag = 'output window, operand 0, single buffered']
    #allocation3 [shape = 's32[1]{0}', space=sflag, size = 0x4, scoped, tag = 'scoped memory for encoder_head.1']
    %7 = vsyncpa [#allocation3], 0
    // Predicated region
    $region2: #{encoder_head.1} parent=1 // pred_check
      _
    $region3: #{encoder_head.1} parent=1 // pred_check_branch
      %9 = sbr.rel (0) target = $region5
    $region4: #{encoder_head.1} parent=1 // pred_region
      _
    $region5: #{encoder_head.1} parent=1 // pred_fallthru
      _
    // Predicated region
    $region6: #{encoder_head.1} parent=1 // pred_check
      _
    $region7: #{encoder_head.1} parent=1 // pred_check_branch
      %11 = sbr.rel (0) target = $region9
    $region8: #{encoder_head.1} parent=1 // pred_region
      _
    $region9: #{encoder_head.1} parent=1 // pred_fallthru
      _
    %v12 = vld [vmem:[%s1] sm:$0xff]
    %v13 = vld [vmem:[%s1 + $0x8] sm:$0xff]
    %v14 = vld [vmem:[%s1 + $0x10] sm:$0xff]
    %v15 = vld [vmem:[%s1 + $0x18] sm:$0xff]
    %v16 = vld [vmem:[%s0] sm:$0xff]
    %v17 = vld [vmem:[%s0 + $0x8] sm:$0xff]
    %v18 = vld [vmem:[%s0 + $0x10] sm:$0xff]
    %v19 = vld [vmem:[%s0 + $0x18] sm:$0xff]
    %v20 = vld [vmem:[%s0 + $0x20] sm:$0xff]
    %v21 = vld [vmem:[%s0 + $0x28] sm:$0xff]
    %v22 = vld [vmem:[%s0 + $0x30] sm:$0xff]
    %v23 = vld [vmem:[%s0 + $0x38] sm:$0xff]
    %v24 = vld [vmem:[%s0 + $0x40] sm:$0xff]
    %v25 = vld [vmem:[%s0 + $0x48] sm:$0xff]
    %v26 = vld [vmem:[%s0 + $0x50] sm:$0xff]
    %v27 = vld [vmem:[%s0 + $0x58] sm:$0xff]
    %v28 = vld [vmem:[%s0 + $0x60] sm:$0xff]
    %v29 = vld [vmem:[%s0 + $0x68] sm:$0xff]
    %v30 = vld [vmem:[%s0 + $0x70] sm:$0xff]
    %v31 = vld [vmem:[%s0 + $0x78] sm:$0xff]
    %v32 = vld [vmem:[%s0 + $0x80] sm:$0xff]
    %v33 = vld [vmem:[%s0 + $0x88] sm:$0xff]
    %v34 = vld [vmem:[%s0 + $0x90] sm:$0xff]
    %v35 = vld [vmem:[%s0 + $0x98] sm:$0xff]
    %v36 = vld [vmem:[%s0 + $0xa0] sm:$0xff]
    %v37 = vld [vmem:[%s0 + $0xa8] sm:$0xff]
    %v38 = vld [vmem:[%s0 + $0xb0] sm:$0xff]
    %v39 = vld [vmem:[%s0 + $0xb8] sm:$0xff]
    %v40 = vld [vmem:[%s0 + $0xc0] sm:$0xff]
    %v41 = vld [vmem:[%s0 + $0xc8] sm:$0xff]
    %v42 = vld [vmem:[%s0 + $0xd0] sm:$0xff]
    %v43 = vld [vmem:[%s0 + $0xd8] sm:$0xff]
    %v44 = vld [vmem:[%s0 + $0xe0] sm:$0xff]
    %v45 = vld [vmem:[%s0 + $0xe8] sm:$0xff]
    %v46 = vld [vmem:[%s0 + $0xf0] sm:$0xff]
    %v47 = vld [vmem:[%s0 + $0xf8] sm:$0xff]
    %v48 = vld [vmem:[%s0 + $0x100] sm:$0xff]
    %v49 = vld [vmem:[%s0 + $0x108] sm:$0xff]
    %v50 = vld [vmem:[%s0 + $0x110] sm:$0xff]
    %v51 = vld [vmem:[%s0 + $0x118] sm:$0xff]
    %v52 = vld [vmem:[%s0 + $0x120] sm:$0xff]
    %v53 = vld [vmem:[%s0 + $0x128] sm:$0xff]
    %v54 = vld [vmem:[%s0 + $0x130] sm:$0xff]
    %v55 = vld [vmem:[%s0 + $0x138] sm:$0xff]
    %v56 = vld [vmem:[%s0 + $0x140] sm:$0xff]
    %v57 = vld [vmem:[%s0 + $0x148] sm:$0xff]
    %v58 = vld [vmem:[%s0 + $0x150] sm:$0xff]
    %v59 = vld [vmem:[%s0 + $0x158] sm:$0xff]
    %v60 = vld [vmem:[%s0 + $0x160] sm:$0xff]
    %v61 = vld [vmem:[%s0 + $0x168] sm:$0xff]
    %v62 = vld [vmem:[%s0 + $0x170] sm:$0xff]
    %v63 = vld [vmem:[%s0 + $0x178] sm:$0xff]
    %v64 = vld [vmem:[%s0 + $0x180] sm:$0xff]
    %v65 = vld [vmem:[%s0 + $0x188] sm:$0xff]
    %v66 = vld [vmem:[%s0 + $0x190] sm:$0xff]
    %v67 = vld [vmem:[%s0 + $0x198] sm:$0xff]
    %v68 = vld [vmem:[%s0 + $0x1a0] sm:$0xff]
    %v69 = vld [vmem:[%s0 + $0x1a8] sm:$0xff]
    %v70 = vld [vmem:[%s0 + $0x1b0] sm:$0xff]
    %v71 = vld [vmem:[%s0 + $0x1b8] sm:$0xff]
    %v72 = vld [vmem:[%s0 + $0x1c0] sm:$0xff]
    %v73 = vld [vmem:[%s0 + $0x1c8] sm:$0xff]
    %v74 = vld [vmem:[%s0 + $0x1d0] sm:$0xff]
    %v75 = vld [vmem:[%s0 + $0x1d8] sm:$0xff]
    %v76 = vld [vmem:[%s0 + $0x1e0] sm:$0xff]
    %v77 = vld [vmem:[%s0 + $0x1e8] sm:$0xff]
    %v78 = vld [vmem:[%s0 + $0x1f0] sm:$0xff]
    %v79 = vld [vmem:[%s0 + $0x1f8] sm:$0xff]
    %v80 = vld [vmem:[%s0 + $0x200] sm:$0xff]
    %v81 = vld [vmem:[%s0 + $0x208] sm:$0xff]
    %v82 = vld [vmem:[%s0 + $0x210] sm:$0xff]
    %v83 = vld [vmem:[%s0 + $0x218] sm:$0xff]
    %v84 = vld [vmem:[%s0 + $0x220] sm:$0xff]
    %v85 = vld [vmem:[%s0 + $0x228] sm:$0xff]
    %v86 = vld [vmem:[%s0 + $0x230] sm:$0xff]
    %v87 = vld [vmem:[%s0 + $0x238] sm:$0xff]
    %v88 = vld [vmem:[%s0 + $0x240] sm:$0xff]
    %v89 = vld [vmem:[%s0 + $0x248] sm:$0xff]
    %v90 = vld [vmem:[%s0 + $0x250] sm:$0xff]
    %v91 = vld [vmem:[%s0 + $0x258] sm:$0xff]
    %v92 = vld [vmem:[%s0 + $0x260] sm:$0xff]
    %v93 = vld [vmem:[%s0 + $0x268] sm:$0xff]
    %v94 = vld [vmem:[%s0 + $0x270] sm:$0xff]
    %v95 = vld [vmem:[%s0 + $0x278] sm:$0xff]
    %v96 = vld [vmem:[%s0 + $0x280] sm:$0xff]
    %v97 = vld [vmem:[%s0 + $0x288] sm:$0xff]
    %v98 = vld [vmem:[%s0 + $0x290] sm:$0xff]
    %v99 = vld [vmem:[%s0 + $0x298] sm:$0xff]
    %v100 = vld [vmem:[%s0 + $0x2a0] sm:$0xff]
    %v101 = vld [vmem:[%s0 + $0x2a8] sm:$0xff]
    %v102 = vld [vmem:[%s0 + $0x2b0] sm:$0xff]
    %v103 = vld [vmem:[%s0 + $0x2b8] sm:$0xff]
    %v104 = vld [vmem:[%s0 + $0x2c0] sm:$0xff]
    %v105 = vld [vmem:[%s0 + $0x2c8] sm:$0xff]
    %v106 = vld [vmem:[%s0 + $0x2d0] sm:$0xff]
    %v107 = vld [vmem:[%s0 + $0x2d8] sm:$0xff]
    %v108 = vld [vmem:[%s0 + $0x2e0] sm:$0xff]
    %v109 = vld [vmem:[%s0 + $0x2e8] sm:$0xff]
    %v110 = vld [vmem:[%s0 + $0x2f0] sm:$0xff]
    %v111 = vld [vmem:[%s0 + $0x2f8] sm:$0xff]
    %v112 = vld [vmem:[%s0 + $0x300] sm:$0xff]
    %v113 = vld [vmem:[%s0 + $0x308] sm:$0xff]
    %v114 = vld [vmem:[%s0 + $0x310] sm:$0xff]
    %v115 = vld [vmem:[%s0 + $0x318] sm:$0xff]
    %v116 = vld [vmem:[%s0 + $0x320] sm:$0xff]
    %v117 = vld [vmem:[%s0 + $0x328] sm:$0xff]
    %v118 = vld [vmem:[%s0 + $0x330] sm:$0xff]
    %v119 = vld [vmem:[%s0 + $0x338] sm:$0xff]
    %v120 = vld [vmem:[%s0 + $0x340] sm:$0xff]
    %v121 = vld [vmem:[%s0 + $0x348] sm:$0xff]
    %v122 = vld [vmem:[%s0 + $0x350] sm:$0xff]
    %v123 = vld [vmem:[%s0 + $0x358] sm:$0xff]
    %v124 = vld [vmem:[%s0 + $0x360] sm:$0xff]
    %v125 = vld [vmem:[%s0 + $0x368] sm:$0xff]
    %v126 = vld [vmem:[%s0 + $0x370] sm:$0xff]
    %v127 = vld [vmem:[%s0 + $0x378] sm:$0xff]
    %v128 = vld [vmem:[%s0 + $0x380] sm:$0xff]
    %v129 = vld [vmem:[%s0 + $0x388] sm:$0xff]
    %v130 = vld [vmem:[%s0 + $0x390] sm:$0xff]
    %v131 = vld [vmem:[%s0 + $0x398] sm:$0xff]
    %v132 = vld [vmem:[%s0 + $0x3a0] sm:$0xff]
    %v133 = vld [vmem:[%s0 + $0x3a8] sm:$0xff]
    %v134 = vld [vmem:[%s0 + $0x3b0] sm:$0xff]
    %v135 = vld [vmem:[%s0 + $0x3b8] sm:$0xff]
    %v136 = vld [vmem:[%s0 + $0x3c0] sm:$0xff]
    %v137 = vld [vmem:[%s0 + $0x3c8] sm:$0xff]
    %v138 = vld [vmem:[%s0 + $0x3d0] sm:$0xff]
    %v139 = vld [vmem:[%s0 + $0x3d8] sm:$0xff]
    %v140 = vld [vmem:[%s0 + $0x3e0] sm:$0xff]
    %v141 = vld [vmem:[%s0 + $0x3e8] sm:$0xff]
    %v142 = vld [vmem:[%s0 + $0x3f0] sm:$0xff]
    %v143 = vld [vmem:[%s0 + $0x3f8] sm:$0xff]
    %v144 = vld [vmem:[%s0 + $0x400] sm:$0xff]
    %v145 = vld [vmem:[%s0 + $0x408] sm:$0xff]
    %v146 = vld [vmem:[%s0 + $0x410] sm:$0xff]
    %v147 = vld [vmem:[%s0 + $0x418] sm:$0xff]
    %v148 = vld [vmem:[%s0 + $0x420] sm:$0xff]
    %v149 = vld [vmem:[%s0 + $0x428] sm:$0xff]
    %v150 = vld [vmem:[%s0 + $0x430] sm:$0xff]
    %v151 = vld [vmem:[%s0 + $0x438] sm:$0xff]
    %v152 = vld [vmem:[%s0 + $0x440] sm:$0xff]
    %v153 = vld [vmem:[%s0 + $0x448] sm:$0xff]
    %v154 = vld [vmem:[%s0 + $0x450] sm:$0xff]
    %v155 = vld [vmem:[%s0 + $0x458] sm:$0xff]
    %v156 = vld [vmem:[%s0 + $0x460] sm:$0xff]
    %v157 = vld [vmem:[%s0 + $0x468] sm:$0xff]
    %v158 = vld [vmem:[%s0 + $0x470] sm:$0xff]
    %v159 = vld [vmem:[%s0 + $0x478] sm:$0xff]
    %v160 = vld [vmem:[%s0 + $0x480] sm:$0xff]
    %v161 = vld [vmem:[%s0 + $0x488] sm:$0xff]
    %v162 = vld [vmem:[%s0 + $0x490] sm:$0xff]
    %v163 = vld [vmem:[%s0 + $0x498] sm:$0xff]
    %v164 = vld [vmem:[%s0 + $0x4a0] sm:$0xff]
    %v165 = vld [vmem:[%s0 + $0x4a8] sm:$0xff]
    %v166 = vld [vmem:[%s0 + $0x4b0] sm:$0xff]
    %v167 = vld [vmem:[%s0 + $0x4b8] sm:$0xff]
    %v168 = vld [vmem:[%s0 + $0x4c0] sm:$0xff]
    %v169 = vld [vmem:[%s0 + $0x4c8] sm:$0xff]
    %v170 = vld [vmem:[%s0 + $0x4d0] sm:$0xff]
    %v171 = vld [vmem:[%s0 + $0x4d8] sm:$0xff]
    %v172 = vld [vmem:[%s0 + $0x4e0] sm:$0xff]
    %v173 = vld [vmem:[%s0 + $0x4e8] sm:$0xff]
    %v174 = vld [vmem:[%s0 + $0x4f0] sm:$0xff]
    %v175 = vld [vmem:[%s0 + $0x4f8] sm:$0xff]
    %v176 = vld [vmem:[%s0 + $0x500] sm:$0xff]
    %v177 = vld [vmem:[%s0 + $0x508] sm:$0xff]
    %v178 = vld [vmem:[%s0 + $0x510] sm:$0xff]
    %v179 = vld [vmem:[%s0 + $0x518] sm:$0xff]
    %v180 = vld [vmem:[%s0 + $0x520] sm:$0xff]
    %v181 = vld [vmem:[%s0 + $0x528] sm:$0xff]
    %v182 = vld [vmem:[%s0 + $0x530] sm:$0xff]
    %v183 = vld [vmem:[%s0 + $0x538] sm:$0xff]
    %v184 = vld [vmem:[%s0 + $0x540] sm:$0xff]
    %v185 = vld [vmem:[%s0 + $0x548] sm:$0xff]
    %v186 = vld [vmem:[%s0 + $0x550] sm:$0xff]
    %v187 = vld [vmem:[%s0 + $0x558] sm:$0xff]
    %v188 = vld [vmem:[%s0 + $0x560] sm:$0xff]
    %v189 = vld [vmem:[%s0 + $0x568] sm:$0xff]
    %v190 = vld [vmem:[%s0 + $0x570] sm:$0xff]
    %v191 = vld [vmem:[%s0 + $0x578] sm:$0xff]
    %v192 = vld [vmem:[%s0 + $0x580] sm:$0xff]
    %v193 = vld [vmem:[%s0 + $0x588] sm:$0xff]
    %v194 = vld [vmem:[%s0 + $0x590] sm:$0xff]
    %v195 = vld [vmem:[%s0 + $0x598] sm:$0xff]
    %v196 = vld [vmem:[%s0 + $0x5a0] sm:$0xff]
    %v197 = vld [vmem:[%s0 + $0x5a8] sm:$0xff]
    %v198 = vld [vmem:[%s0 + $0x5b0] sm:$0xff]
    %v199 = vld [vmem:[%s0 + $0x5b8] sm:$0xff]
    %v200 = vld [vmem:[%s0 + $0x5c0] sm:$0xff]
    %v201 = vld [vmem:[%s0 + $0x5c8] sm:$0xff]
    %v202 = vld [vmem:[%s0 + $0x5d0] sm:$0xff]
    %v203 = vld [vmem:[%s0 + $0x5d8] sm:$0xff]
    %v204 = vld [vmem:[%s0 + $0x5e0] sm:$0xff]
    %v205 = vld [vmem:[%s0 + $0x5e8] sm:$0xff]
    %v206 = vld [vmem:[%s0 + $0x5f0] sm:$0xff]
    %v207 = vld [vmem:[%s0 + $0x5f8] sm:$0xff]
    %v208 = vld [vmem:[%s0 + $0x600] sm:$0xff]
    %v209 = vld [vmem:[%s0 + $0x608] sm:$0xff]
    %v210 = vld [vmem:[%s0 + $0x610] sm:$0xff]
    %v211 = vld [vmem:[%s0 + $0x618] sm:$0xff]
    %v212 = vld [vmem:[%s0 + $0x620] sm:$0xff]
    %v213 = vld [vmem:[%s0 + $0x628] sm:$0xff]
    %v214 = vld [vmem:[%s0 + $0x630] sm:$0xff]
    %v215 = vld [vmem:[%s0 + $0x638] sm:$0xff]
    %v216 = vld [vmem:[%s0 + $0x640] sm:$0xff]
    %v217 = vld [vmem:[%s0 + $0x648] sm:$0xff]
    %v218 = vld [vmem:[%s0 + $0x650] sm:$0xff]
    %v219 = vld [vmem:[%s0 + $0x658] sm:$0xff]
    %v220 = vld [vmem:[%s0 + $0x660] sm:$0xff]
    %v221 = vld [vmem:[%s0 + $0x668] sm:$0xff]
    %v222 = vld [vmem:[%s0 + $0x670] sm:$0xff]
    %v223 = vld [vmem:[%s0 + $0x678] sm:$0xff]
    %v224 = vld [vmem:[%s0 + $0x680] sm:$0xff]
    %v225 = vld [vmem:[%s0 + $0x688] sm:$0xff]
    %v226 = vld [vmem:[%s0 + $0x690] sm:$0xff]
    %v227 = vld [vmem:[%s0 + $0x698] sm:$0xff]
    %v228 = vld [vmem:[%s0 + $0x6a0] sm:$0xff]
    %v229 = vld [vmem:[%s0 + $0x6a8] sm:$0xff]
    %v230 = vld [vmem:[%s0 + $0x6b0] sm:$0xff]
    %v231 = vld [vmem:[%s0 + $0x6b8] sm:$0xff]
    %v232 = vld [vmem:[%s0 + $0x6c0] sm:$0xff]
    %v233 = vld [vmem:[%s0 + $0x6c8] sm:$0xff]
    %v234 = vld [vmem:[%s0 + $0x6d0] sm:$0xff]
    %v235 = vld [vmem:[%s0 + $0x6d8] sm:$0xff]
    %v236 = vld [vmem:[%s0 + $0x6e0] sm:$0xff]
    %v237 = vld [vmem:[%s0 + $0x6e8] sm:$0xff]
    %v238 = vld [vmem:[%s0 + $0x6f0] sm:$0xff]
    %v239 = vld [vmem:[%s0 + $0x6f8] sm:$0xff]
    %v240 = vld [vmem:[%s0 + $0x700] sm:$0xff]
    %v241 = vld [vmem:[%s0 + $0x708] sm:$0xff]
    %v242 = vld [vmem:[%s0 + $0x710] sm:$0xff]
    %v243 = vld [vmem:[%s0 + $0x718] sm:$0xff]
    %v244 = vld [vmem:[%s0 + $0x720] sm:$0xff]
    %v245 = vld [vmem:[%s0 + $0x728] sm:$0xff]
    %v246 = vld [vmem:[%s0 + $0x730] sm:$0xff]
    %v247 = vld [vmem:[%s0 + $0x738] sm:$0xff]
    %v248 = vld [vmem:[%s0 + $0x740] sm:$0xff]
    %v249 = vld [vmem:[%s0 + $0x748] sm:$0xff]
    %v250 = vld [vmem:[%s0 + $0x750] sm:$0xff]
    %v251 = vld [vmem:[%s0 + $0x758] sm:$0xff]
    %v252 = vld [vmem:[%s0 + $0x760] sm:$0xff]
    %v253 = vld [vmem:[%s0 + $0x768] sm:$0xff]
    %v254 = vld [vmem:[%s0 + $0x770] sm:$0xff]
    %v255 = vld [vmem:[%s0 + $0x778] sm:$0xff]
    %vm256 = vcmask 523264
    %v257 = vsel %vm256, %v16, 0.0
    %258 = vadd.xlane.f32.xlu0 %v257
    %v259 = vpop.xlane.xlu0 %258
    %v260 = vsel %vm256, %v17, 0.0
    %261 = vadd.xlane.f32.xlu0 %v260
    %v262 = vpop.xlane.xlu0 %261
    %v263 = vsel %vm256, %v18, 0.0
    %264 = vadd.xlane.f32.xlu0 %v263
    %v265 = vpop.xlane.xlu0 %264
    %v266 = vsel %vm256, %v19, 0.0
    %267 = vadd.xlane.f32.xlu0 %v266
    %v268 = vpop.xlane.xlu0 %267
    %v269 = vsel %vm256, %v20, 0.0
    %270 = vadd.xlane.f32.xlu0 %v269
    %v271 = vpop.xlane.xlu0 %270
    %v272 = vsel %vm256, %v21, 0.0
    %273 = vadd.xlane.f32.xlu0 %v272
    %v274 = vpop.xlane.xlu0 %273
    %v275 = vsel %vm256, %v22, 0.0
    %276 = vadd.xlane.f32.xlu0 %v275
    %v277 = vpop.xlane.xlu0 %276
    %v278 = vsel %vm256, %v23, 0.0
    %279 = vadd.xlane.f32.xlu0 %v278
    %v280 = vpop.xlane.xlu0 %279
    %v281 = vsel %vm256, %v24, 0.0
    %282 = vadd.xlane.f32.xlu0 %v281
    %v283 = vpop.xlane.xlu0 %282
    %v284 = vsel %vm256, %v25, 0.0
    %285 = vadd.xlane.f32.xlu0 %v284
    %v286 = vpop.xlane.xlu0 %285
    %v287 = vsel %vm256, %v26, 0.0
    %288 = vadd.xlane.f32.xlu0 %v287
    %v289 = vpop.xlane.xlu0 %288
    %v290 = vsel %vm256, %v27, 0.0
    %291 = vadd.xlane.f32.xlu0 %v290
    %v292 = vpop.xlane.xlu0 %291
    %v293 = vsel %vm256, %v28, 0.0
    %294 = vadd.xlane.f32.xlu0 %v293
    %v295 = vpop.xlane.xlu0 %294
    %v296 = vsel %vm256, %v29, 0.0
    %297 = vadd.xlane.f32.xlu0 %v296
    %v298 = vpop.xlane.xlu0 %297
    %v299 = vsel %vm256, %v30, 0.0
    %300 = vadd.xlane.f32.xlu0 %v299
    %v301 = vpop.xlane.xlu0 %300
    %v302 = vsel %vm256, %v31, 0.0
    %303 = vadd.xlane.f32.xlu0 %v302
    %v304 = vpop.xlane.xlu0 %303
    %v305 = vsel %vm256, %v32, 0.0
    %306 = vadd.xlane.f32.xlu0 %v305
    %v307 = vpop.xlane.xlu0 %306
    %v308 = vsel %vm256, %v33, 0.0
    %309 = vadd.xlane.f32.xlu0 %v308
    %v310 = vpop.xlane.xlu0 %309
    %v311 = vsel %vm256, %v34, 0.0
    %312 = vadd.xlane.f32.xlu0 %v311
    %v313 = vpop.xlane.xlu0 %312
    %v314 = vsel %vm256, %v35, 0.0
    %315 = vadd.xlane.f32.xlu0 %v314
    %v316 = vpop.xlane.xlu0 %315
    %v317 = vsel %vm256, %v36, 0.0
    %318 = vadd.xlane.f32.xlu0 %v317
    %v319 = vpop.xlane.xlu0 %318
    %v320 = vsel %vm256, %v37, 0.0
    %321 = vadd.xlane.f32.xlu0 %v320
    %v322 = vpop.xlane.xlu0 %321
    %v323 = vsel %vm256, %v38, 0.0
    %324 = vadd.xlane.f32.xlu0 %v323
    %v325 = vpop.xlane.xlu0 %324
    %v326 = vsel %vm256, %v39, 0.0
    %327 = vadd.xlane.f32.xlu0 %v326
    %v328 = vpop.xlane.xlu0 %327
    %v329 = vsel %vm256, %v40, 0.0
    %330 = vadd.xlane.f32.xlu0 %v329
    %v331 = vpop.xlane.xlu0 %330
    %v332 = vsel %vm256, %v41, 0.0
    %333 = vadd.xlane.f32.xlu0 %v332
    %v334 = vpop.xlane.xlu0 %333
    %v335 = vsel %vm256, %v42, 0.0
    %336 = vadd.xlane.f32.xlu0 %v335
    %v337 = vpop.xlane.xlu0 %336
    %v338 = vsel %vm256, %v43, 0.0
    %339 = vadd.xlane.f32.xlu0 %v338
    %v340 = vpop.xlane.xlu0 %339
    %v341 = vsel %vm256, %v44, 0.0
    %342 = vadd.xlane.f32.xlu0 %v341
    %v343 = vpop.xlane.xlu0 %342
    %v344 = vsel %vm256, %v45, 0.0
    %345 = vadd.xlane.f32.xlu0 %v344
    %v346 = vpop.xlane.xlu0 %345
    %v347 = vsel %vm256, %v46, 0.0
    %348 = vadd.xlane.f32.xlu0 %v347
    %v349 = vpop.xlane.xlu0 %348
    %v350 = vsel %vm256, %v47, 0.0
    %351 = vadd.xlane.f32.xlu0 %v350
    %v352 = vpop.xlane.xlu0 %351
    %v353 = vsel %vm256, %v48, 0.0
    %354 = vadd.xlane.f32.xlu0 %v353
    %v355 = vpop.xlane.xlu0 %354
    %v356 = vsel %vm256, %v49, 0.0
    %357 = vadd.xlane.f32.xlu0 %v356
    %v358 = vpop.xlane.xlu0 %357
    %v359 = vsel %vm256, %v50, 0.0
    %360 = vadd.xlane.f32.xlu0 %v359
    %v361 = vpop.xlane.xlu0 %360
    %v362 = vsel %vm256, %v51, 0.0
    %363 = vadd.xlane.f32.xlu0 %v362
    %v364 = vpop.xlane.xlu0 %363
    %v365 = vsel %vm256, %v52, 0.0
    %366 = vadd.xlane.f32.xlu0 %v365
    %v367 = vpop.xlane.xlu0 %366
    %v368 = vsel %vm256, %v53, 0.0
    %369 = vadd.xlane.f32.xlu0 %v368
    %v370 = vpop.xlane.xlu0 %369
    %v371 = vsel %vm256, %v54, 0.0
    %372 = vadd.xlane.f32.xlu0 %v371
    %v373 = vpop.xlane.xlu0 %372
    %v374 = vsel %vm256, %v55, 0.0
    %375 = vadd.xlane.f32.xlu0 %v374
    %v376 = vpop.xlane.xlu0 %375
    %v377 = vsel %vm256, %v56, 0.0
    %378 = vadd.xlane.f32.xlu0 %v377
    %v379 = vpop.xlane.xlu0 %378
    %v380 = vsel %vm256, %v57, 0.0
    %381 = vadd.xlane.f32.xlu0 %v380
    %v382 = vpop.xlane.xlu0 %381
    %v383 = vsel %vm256, %v58, 0.0
    %384 = vadd.xlane.f32.xlu0 %v383
    %v385 = vpop.xlane.xlu0 %384
    %v386 = vsel %vm256, %v59, 0.0
    %387 = vadd.xlane.f32.xlu0 %v386
    %v388 = vpop.xlane.xlu0 %387
    %v389 = vsel %vm256, %v60, 0.0
    %390 = vadd.xlane.f32.xlu0 %v389
    %v391 = vpop.xlane.xlu0 %390
    %v392 = vsel %vm256, %v61, 0.0
    %393 = vadd.xlane.f32.xlu0 %v392
    %v394 = vpop.xlane.xlu0 %393
    %v395 = vsel %vm256, %v62, 0.0
    %396 = vadd.xlane.f32.xlu0 %v395
    %v397 = vpop.xlane.xlu0 %396
    %v398 = vsel %vm256, %v63, 0.0
    %399 = vadd.xlane.f32.xlu0 %v398
    %v400 = vpop.xlane.xlu0 %399
    %v401 = vsel %vm256, %v64, 0.0
    %402 = vadd.xlane.f32.xlu0 %v401
    %v403 = vpop.xlane.xlu0 %402
    %v404 = vsel %vm256, %v65, 0.0
    %405 = vadd.xlane.f32.xlu0 %v404
    %v406 = vpop.xlane.xlu0 %405
    %v407 = vsel %vm256, %v66, 0.0
    %408 = vadd.xlane.f32.xlu0 %v407
    %v409 = vpop.xlane.xlu0 %408
    %v410 = vsel %vm256, %v67, 0.0
    %411 = vadd.xlane.f32.xlu0 %v410
    %v412 = vpop.xlane.xlu0 %411
    %v413 = vsel %vm256, %v68, 0.0
    %414 = vadd.xlane.f32.xlu0 %v413
    %v415 = vpop.xlane.xlu0 %414
    %v416 = vsel %vm256, %v69, 0.0
    %417 = vadd.xlane.f32.xlu0 %v416
    %v418 = vpop.xlane.xlu0 %417
    %v419 = vsel %vm256, %v70, 0.0
    %420 = vadd.xlane.f32.xlu0 %v419
    %v421 = vpop.xlane.xlu0 %420
    %v422 = vsel %vm256, %v71, 0.0
    %423 = vadd.xlane.f32.xlu0 %v422
    %v424 = vpop.xlane.xlu0 %423
    %v425 = vsel %vm256, %v72, 0.0
    %426 = vadd.xlane.f32.xlu0 %v425
    %v427 = vpop.xlane.xlu0 %426
    %v428 = vsel %vm256, %v73, 0.0
    %429 = vadd.xlane.f32.xlu0 %v428
    %v430 = vpop.xlane.xlu0 %429
    %v431 = vsel %vm256, %v74, 0.0
    %432 = vadd.xlane.f32.xlu0 %v431
    %v433 = vpop.xlane.xlu0 %432
    %v434 = vsel %vm256, %v75, 0.0
    %435 = vadd.xlane.f32.xlu0 %v434
    %v436 = vpop.xlane.xlu0 %435
    %v437 = vsel %vm256, %v76, 0.0
    %438 = vadd.xlane.f32.xlu0 %v437
    %v439 = vpop.xlane.xlu0 %438
    %v440 = vsel %vm256, %v77, 0.0
    %441 = vadd.xlane.f32.xlu0 %v440
    %v442 = vpop.xlane.xlu0 %441
    %v443 = vsel %vm256, %v78, 0.0
    %444 = vadd.xlane.f32.xlu0 %v443
    %v445 = vpop.xlane.xlu0 %444
    %v446 = vsel %vm256, %v79, 0.0
    %447 = vadd.xlane.f32.xlu0 %v446
    %v448 = vpop.xlane.xlu0 %447
    %v449 = vsel %vm256, %v80, 0.0
    %450 = vadd.xlane.f32.xlu0 %v449
    %v451 = vpop.xlane.xlu0 %450
    %v452 = vsel %vm256, %v81, 0.0
    %453 = vadd.xlane.f32.xlu0 %v452
    %v454 = vpop.xlane.xlu0 %453
    %v455 = vsel %vm256, %v82, 0.0
    %456 = vadd.xlane.f32.xlu0 %v455
    %v457 = vpop.xlane.xlu0 %456
    %v458 = vsel %vm256, %v83, 0.0
    %459 = vadd.xlane.f32.xlu0 %v458
    %v460 = vpop.xlane.xlu0 %459
    %v461 = vsel %vm256, %v84, 0.0
    %462 = vadd.xlane.f32.xlu0 %v461
    %v463 = vpop.xlane.xlu0 %462
    %v464 = vsel %vm256, %v85, 0.0
    %465 = vadd.xlane.f32.xlu0 %v464
    %v466 = vpop.xlane.xlu0 %465
    %v467 = vsel %vm256, %v86, 0.0
    %468 = vadd.xlane.f32.xlu0 %v467
    %v469 = vpop.xlane.xlu0 %468
    %v470 = vsel %vm256, %v87, 0.0
    %471 = vadd.xlane.f32.xlu0 %v470
    %v472 = vpop.xlane.xlu0 %471
    %v473 = vsel %vm256, %v88, 0.0
    %474 = vadd.xlane.f32.xlu0 %v473
    %v475 = vpop.xlane.xlu0 %474
    %v476 = vsel %vm256, %v89, 0.0
    %477 = vadd.xlane.f32.xlu0 %v476
    %v478 = vpop.xlane.xlu0 %477
    %v479 = vsel %vm256, %v90, 0.0
    %480 = vadd.xlane.f32.xlu0 %v479
    %v481 = vpop.xlane.xlu0 %480
    %v482 = vsel %vm256, %v91, 0.0
    %483 = vadd.xlane.f32.xlu0 %v482
    %v484 = vpop.xlane.xlu0 %483
    %v485 = vsel %vm256, %v92, 0.0
    %486 = vadd.xlane.f32.xlu0 %v485
    %v487 = vpop.xlane.xlu0 %486
    %v488 = vsel %vm256, %v93, 0.0
    %489 = vadd.xlane.f32.xlu0 %v488
    %v490 = vpop.xlane.xlu0 %489
    %v491 = vsel %vm256, %v94, 0.0
    %492 = vadd.xlane.f32.xlu0 %v491
    %v493 = vpop.xlane.xlu0 %492
    %v494 = vsel %vm256, %v95, 0.0
    %495 = vadd.xlane.f32.xlu0 %v494
    %v496 = vpop.xlane.xlu0 %495
    %v497 = vsel %vm256, %v96, 0.0
    %498 = vadd.xlane.f32.xlu0 %v497
    %v499 = vpop.xlane.xlu0 %498
    %v500 = vsel %vm256, %v97, 0.0
    %501 = vadd.xlane.f32.xlu0 %v500
    %v502 = vpop.xlane.xlu0 %501
    %v503 = vsel %vm256, %v98, 0.0
    %504 = vadd.xlane.f32.xlu0 %v503
    %v505 = vpop.xlane.xlu0 %504
    %v506 = vsel %vm256, %v99, 0.0
    %507 = vadd.xlane.f32.xlu0 %v506
    %v508 = vpop.xlane.xlu0 %507
    %v509 = vsel %vm256, %v100, 0.0
    %510 = vadd.xlane.f32.xlu0 %v509
    %v511 = vpop.xlane.xlu0 %510
    %v512 = vsel %vm256, %v101, 0.0
    %513 = vadd.xlane.f32.xlu0 %v512
    %v514 = vpop.xlane.xlu0 %513
    %v515 = vsel %vm256, %v102, 0.0
    %516 = vadd.xlane.f32.xlu0 %v515
    %v517 = vpop.xlane.xlu0 %516
    %v518 = vsel %vm256, %v103, 0.0
    %519 = vadd.xlane.f32.xlu0 %v518
    %v520 = vpop.xlane.xlu0 %519
    %v521 = vsel %vm256, %v104, 0.0
    %522 = vadd.xlane.f32.xlu0 %v521
    %v523 = vpop.xlane.xlu0 %522
    %v524 = vsel %vm256, %v105, 0.0
    %525 = vadd.xlane.f32.xlu0 %v524
    %v526 = vpop.xlane.xlu0 %525
    %v527 = vsel %vm256, %v106, 0.0
    %528 = vadd.xlane.f32.xlu0 %v527
    %v529 = vpop.xlane.xlu0 %528
    %v530 = vsel %vm256, %v107, 0.0
    %531 = vadd.xlane.f32.xlu0 %v530
    %v532 = vpop.xlane.xlu0 %531
    %v533 = vsel %vm256, %v108, 0.0
    %534 = vadd.xlane.f32.xlu0 %v533
    %v535 = vpop.xlane.xlu0 %534
    %v536 = vsel %vm256, %v109, 0.0
    %537 = vadd.xlane.f32.xlu0 %v536
    %v538 = vpop.xlane.xlu0 %537
    %v539 = vsel %vm256, %v110, 0.0
    %540 = vadd.xlane.f32.xlu0 %v539
    %v541 = vpop.xlane.xlu0 %540
    %v542 = vsel %vm256, %v111, 0.0
    %543 = vadd.xlane.f32.xlu0 %v542
    %v544 = vpop.xlane.xlu0 %543
    %v545 = vsel %vm256, %v112, 0.0
    %546 = vadd.xlane.f32.xlu0 %v545
    %v547 = vpop.xlane.xlu0 %546
    %v548 = vsel %vm256, %v113, 0.0
    %549 = vadd.xlane.f32.xlu0 %v548
    %v550 = vpop.xlane.xlu0 %549
    %v551 = vsel %vm256, %v114, 0.0
    %552 = vadd.xlane.f32.xlu0 %v551
    %v553 = vpop.xlane.xlu0 %552
    %v554 = vsel %vm256, %v115, 0.0
    %555 = vadd.xlane.f32.xlu0 %v554
    %v556 = vpop.xlane.xlu0 %555
    %v557 = vsel %vm256, %v116, 0.0
    %558 = vadd.xlane.f32.xlu0 %v557
    %v559 = vpop.xlane.xlu0 %558
    %v560 = vsel %vm256, %v117, 0.0
    %561 = vadd.xlane.f32.xlu0 %v560
    %v562 = vpop.xlane.xlu0 %561
    %v563 = vsel %vm256, %v118, 0.0
    %564 = vadd.xlane.f32.xlu0 %v563
    %v565 = vpop.xlane.xlu0 %564
    %v566 = vsel %vm256, %v119, 0.0
    %567 = vadd.xlane.f32.xlu0 %v566
    %v568 = vpop.xlane.xlu0 %567
    %v569 = vsel %vm256, %v120, 0.0
    %570 = vadd.xlane.f32.xlu0 %v569
    %v571 = vpop.xlane.xlu0 %570
    %v572 = vsel %vm256, %v121, 0.0
    %573 = vadd.xlane.f32.xlu0 %v572
    %v574 = vpop.xlane.xlu0 %573
    %v575 = vsel %vm256, %v122, 0.0
    %576 = vadd.xlane.f32.xlu0 %v575
    %v577 = vpop.xlane.xlu0 %576
    %v578 = vsel %vm256, %v123, 0.0
    %579 = vadd.xlane.f32.xlu0 %v578
    %v580 = vpop.xlane.xlu0 %579
    %v581 = vsel %vm256, %v124, 0.0
    %582 = vadd.xlane.f32.xlu0 %v581
    %v583 = vpop.xlane.xlu0 %582
    %v584 = vsel %vm256, %v125, 0.0
    %585 = vadd.xlane.f32.xlu0 %v584
    %v586 = vpop.xlane.xlu0 %585
    %v587 = vsel %vm256, %v126, 0.0
    %588 = vadd.xlane.f32.xlu0 %v587
    %v589 = vpop.xlane.xlu0 %588
    %v590 = vsel %vm256, %v127, 0.0
    %591 = vadd.xlane.f32.xlu0 %v590
    %v592 = vpop.xlane.xlu0 %591
    %v593 = vsel %vm256, %v128, 0.0
    %594 = vadd.xlane.f32.xlu0 %v593
    %v595 = vpop.xlane.xlu0 %594
    %v596 = vsel %vm256, %v129, 0.0
    %597 = vadd.xlane.f32.xlu0 %v596
    %v598 = vpop.xlane.xlu0 %597
    %v599 = vsel %vm256, %v130, 0.0
    %600 = vadd.xlane.f32.xlu0 %v599
    %v601 = vpop.xlane.xlu0 %600
    %v602 = vsel %vm256, %v131, 0.0
    %603 = vadd.xlane.f32.xlu0 %v602
    %v604 = vpop.xlane.xlu0 %603
    %v605 = vsel %vm256, %v132, 0.0
    %606 = vadd.xlane.f32.xlu0 %v605
    %v607 = vpop.xlane.xlu0 %606
    %v608 = vsel %vm256, %v133, 0.0
    %609 = vadd.xlane.f32.xlu0 %v608
    %v610 = vpop.xlane.xlu0 %609
    %v611 = vsel %vm256, %v134, 0.0
    %612 = vadd.xlane.f32.xlu0 %v611
    %v613 = vpop.xlane.xlu0 %612
    %v614 = vsel %vm256, %v135, 0.0
    %615 = vadd.xlane.f32.xlu0 %v614
    %v616 = vpop.xlane.xlu0 %615
    %v617 = vsel %vm256, %v136, 0.0
    %618 = vadd.xlane.f32.xlu0 %v617
    %v619 = vpop.xlane.xlu0 %618
    %v620 = vsel %vm256, %v137, 0.0
    %621 = vadd.xlane.f32.xlu0 %v620
    %v622 = vpop.xlane.xlu0 %621
    %v623 = vsel %vm256, %v138, 0.0
    %624 = vadd.xlane.f32.xlu0 %v623
    %v625 = vpop.xlane.xlu0 %624
    %v626 = vsel %vm256, %v139, 0.0
    %627 = vadd.xlane.f32.xlu0 %v626
    %v628 = vpop.xlane.xlu0 %627
    %v629 = vsel %vm256, %v140, 0.0
    %630 = vadd.xlane.f32.xlu0 %v629
    %v631 = vpop.xlane.xlu0 %630
    %v632 = vsel %vm256, %v141, 0.0
    %633 = vadd.xlane.f32.xlu0 %v632
    %v634 = vpop.xlane.xlu0 %633
    %v635 = vsel %vm256, %v142, 0.0
    %636 = vadd.xlane.f32.xlu0 %v635
    %v637 = vpop.xlane.xlu0 %636
    %v638 = vsel %vm256, %v143, 0.0
    %639 = vadd.xlane.f32.xlu0 %v638
    %v640 = vpop.xlane.xlu0 %639
    %v641 = vsel %vm256, %v144, 0.0
    %642 = vadd.xlane.f32.xlu0 %v641
    %v643 = vpop.xlane.xlu0 %642
    %v644 = vsel %vm256, %v145, 0.0
    %645 = vadd.xlane.f32.xlu0 %v644
    %v646 = vpop.xlane.xlu0 %645
    %v647 = vsel %vm256, %v146, 0.0
    %648 = vadd.xlane.f32.xlu0 %v647
    %v649 = vpop.xlane.xlu0 %648
    %v650 = vsel %vm256, %v147, 0.0
    %651 = vadd.xlane.f32.xlu0 %v650
    %v652 = vpop.xlane.xlu0 %651
    %v653 = vsel %vm256, %v148, 0.0
    %654 = vadd.xlane.f32.xlu0 %v653
    %v655 = vpop.xlane.xlu0 %654
    %v656 = vsel %vm256, %v149, 0.0
    %657 = vadd.xlane.f32.xlu0 %v656
    %v658 = vpop.xlane.xlu0 %657
    %v659 = vsel %vm256, %v150, 0.0
    %660 = vadd.xlane.f32.xlu0 %v659
    %v661 = vpop.xlane.xlu0 %660
    %v662 = vsel %vm256, %v151, 0.0
    %663 = vadd.xlane.f32.xlu0 %v662
    %v664 = vpop.xlane.xlu0 %663
    %v665 = vsel %vm256, %v152, 0.0
    %666 = vadd.xlane.f32.xlu0 %v665
    %v667 = vpop.xlane.xlu0 %666
    %v668 = vsel %vm256, %v153, 0.0
    %669 = vadd.xlane.f32.xlu0 %v668
    %v670 = vpop.xlane.xlu0 %669
    %v671 = vsel %vm256, %v154, 0.0
    %672 = vadd.xlane.f32.xlu0 %v671
    %v673 = vpop.xlane.xlu0 %672
    %v674 = vsel %vm256, %v155, 0.0
    %675 = vadd.xlane.f32.xlu0 %v674
    %v676 = vpop.xlane.xlu0 %675
    %v677 = vsel %vm256, %v156, 0.0
    %678 = vadd.xlane.f32.xlu0 %v677
    %v679 = vpop.xlane.xlu0 %678
    %v680 = vsel %vm256, %v157, 0.0
    %681 = vadd.xlane.f32.xlu0 %v680
    %v682 = vpop.xlane.xlu0 %681
    %v683 = vsel %vm256, %v158, 0.0
    %684 = vadd.xlane.f32.xlu0 %v683
    %v685 = vpop.xlane.xlu0 %684
    %v686 = vsel %vm256, %v159, 0.0
    %687 = vadd.xlane.f32.xlu0 %v686
    %v688 = vpop.xlane.xlu0 %687
    %v689 = vsel %vm256, %v160, 0.0
    %690 = vadd.xlane.f32.xlu0 %v689
    %v691 = vpop.xlane.xlu0 %690
    %v692 = vsel %vm256, %v161, 0.0
    %693 = vadd.xlane.f32.xlu0 %v692
    %v694 = vpop.xlane.xlu0 %693
    %v695 = vsel %vm256, %v162, 0.0
    %696 = vadd.xlane.f32.xlu0 %v695
    %v697 = vpop.xlane.xlu0 %696
    %v698 = vsel %vm256, %v163, 0.0
    %699 = vadd.xlane.f32.xlu0 %v698
    %v700 = vpop.xlane.xlu0 %699
    %v701 = vsel %vm256, %v164, 0.0
    %702 = vadd.xlane.f32.xlu0 %v701
    %v703 = vpop.xlane.xlu0 %702
    %v704 = vsel %vm256, %v165, 0.0
    %705 = vadd.xlane.f32.xlu0 %v704
    %v706 = vpop.xlane.xlu0 %705
    %v707 = vsel %vm256, %v166, 0.0
    %708 = vadd.xlane.f32.xlu0 %v707
    %v709 = vpop.xlane.xlu0 %708
    %v710 = vsel %vm256, %v167, 0.0
    %711 = vadd.xlane.f32.xlu0 %v710
    %v712 = vpop.xlane.xlu0 %711
    %v713 = vsel %vm256, %v168, 0.0
    %714 = vadd.xlane.f32.xlu0 %v713
    %v715 = vpop.xlane.xlu0 %714
    %v716 = vsel %vm256, %v169, 0.0
    %717 = vadd.xlane.f32.xlu0 %v716
    %v718 = vpop.xlane.xlu0 %717
    %v719 = vsel %vm256, %v170, 0.0
    %720 = vadd.xlane.f32.xlu0 %v719
    %v721 = vpop.xlane.xlu0 %720
    %v722 = vsel %vm256, %v171, 0.0
    %723 = vadd.xlane.f32.xlu0 %v722
    %v724 = vpop.xlane.xlu0 %723
    %v725 = vsel %vm256, %v172, 0.0
    %726 = vadd.xlane.f32.xlu0 %v725
    %v727 = vpop.xlane.xlu0 %726
    %v728 = vsel %vm256, %v173, 0.0
    %729 = vadd.xlane.f32.xlu0 %v728
    %v730 = vpop.xlane.xlu0 %729
    %v731 = vsel %vm256, %v174, 0.0
    %732 = vadd.xlane.f32.xlu0 %v731
    %v733 = vpop.xlane.xlu0 %732
    %v734 = vsel %vm256, %v175, 0.0
    %735 = vadd.xlane.f32.xlu0 %v734
    %v736 = vpop.xlane.xlu0 %735
    %v737 = vsel %vm256, %v176, 0.0
    %738 = vadd.xlane.f32.xlu0 %v737
    %v739 = vpop.xlane.xlu0 %738
    %v740 = vsel %vm256, %v177, 0.0
    %741 = vadd.xlane.f32.xlu0 %v740
    %v742 = vpop.xlane.xlu0 %741
    %v743 = vsel %vm256, %v178, 0.0
    %744 = vadd.xlane.f32.xlu0 %v743
    %v745 = vpop.xlane.xlu0 %744
    %v746 = vsel %vm256, %v179, 0.0
    %747 = vadd.xlane.f32.xlu0 %v746
    %v748 = vpop.xlane.xlu0 %747
    %v749 = vsel %vm256, %v180, 0.0
    %750 = vadd.xlane.f32.xlu0 %v749
    %v751 = vpop.xlane.xlu0 %750
    %v752 = vsel %vm256, %v181, 0.0
    %753 = vadd.xlane.f32.xlu0 %v752
    %v754 = vpop.xlane.xlu0 %753
    %v755 = vsel %vm256, %v182, 0.0
    %756 = vadd.xlane.f32.xlu0 %v755
    %v757 = vpop.xlane.xlu0 %756
    %v758 = vsel %vm256, %v183, 0.0
    %759 = vadd.xlane.f32.xlu0 %v758
    %v760 = vpop.xlane.xlu0 %759
    %v761 = vsel %vm256, %v184, 0.0
    %762 = vadd.xlane.f32.xlu0 %v761
    %v763 = vpop.xlane.xlu0 %762
    %v764 = vsel %vm256, %v185, 0.0
    %765 = vadd.xlane.f32.xlu0 %v764
    %v766 = vpop.xlane.xlu0 %765
    %v767 = vsel %vm256, %v186, 0.0
    %768 = vadd.xlane.f32.xlu0 %v767
    %v769 = vpop.xlane.xlu0 %768
    %v770 = vsel %vm256, %v187, 0.0
    %771 = vadd.xlane.f32.xlu0 %v770
    %v772 = vpop.xlane.xlu0 %771
    %v773 = vsel %vm256, %v188, 0.0
    %774 = vadd.xlane.f32.xlu0 %v773
    %v775 = vpop.xlane.xlu0 %774
    %v776 = vsel %vm256, %v189, 0.0
    %777 = vadd.xlane.f32.xlu0 %v776
    %v778 = vpop.xlane.xlu0 %777
    %v779 = vsel %vm256, %v190, 0.0
    %780 = vadd.xlane.f32.xlu0 %v779
    %v781 = vpop.xlane.xlu0 %780
    %v782 = vsel %vm256, %v191, 0.0
    %783 = vadd.xlane.f32.xlu0 %v782
    %v784 = vpop.xlane.xlu0 %783
    %v785 = vsel %vm256, %v192, 0.0
    %786 = vadd.xlane.f32.xlu0 %v785
    %v787 = vpop.xlane.xlu0 %786
    %v788 = vsel %vm256, %v193, 0.0
    %789 = vadd.xlane.f32.xlu0 %v788
    %v790 = vpop.xlane.xlu0 %789
    %v791 = vsel %vm256, %v194, 0.0
    %792 = vadd.xlane.f32.xlu0 %v791
    %v793 = vpop.xlane.xlu0 %792
    %v794 = vsel %vm256, %v195, 0.0
    %795 = vadd.xlane.f32.xlu0 %v794
    %v796 = vpop.xlane.xlu0 %795
    %v797 = vsel %vm256, %v196, 0.0
    %798 = vadd.xlane.f32.xlu0 %v797
    %v799 = vpop.xlane.xlu0 %798
    %v800 = vsel %vm256, %v197, 0.0
    %801 = vadd.xlane.f32.xlu0 %v800
    %v802 = vpop.xlane.xlu0 %801
    %v803 = vsel %vm256, %v198, 0.0
    %804 = vadd.xlane.f32.xlu0 %v803
    %v805 = vpop.xlane.xlu0 %804
    %v806 = vsel %vm256, %v199, 0.0
    %807 = vadd.xlane.f32.xlu0 %v806
    %v808 = vpop.xlane.xlu0 %807
    %v809 = vsel %vm256, %v200, 0.0
    %810 = vadd.xlane.f32.xlu0 %v809
    %v811 = vpop.xlane.xlu0 %810
    %v812 = vsel %vm256, %v201, 0.0
    %813 = vadd.xlane.f32.xlu0 %v812
    %v814 = vpop.xlane.xlu0 %813
    %v815 = vsel %vm256, %v202, 0.0
    %816 = vadd.xlane.f32.xlu0 %v815
    %v817 = vpop.xlane.xlu0 %816
    %v818 = vsel %vm256, %v203, 0.0
    %819 = vadd.xlane.f32.xlu0 %v818
    %v820 = vpop.xlane.xlu0 %819
    %v821 = vsel %vm256, %v204, 0.0
    %822 = vadd.xlane.f32.xlu0 %v821
    %v823 = vpop.xlane.xlu0 %822
    %v824 = vsel %vm256, %v205, 0.0
    %825 = vadd.xlane.f32.xlu0 %v824
    %v826 = vpop.xlane.xlu0 %825
    %v827 = vsel %vm256, %v206, 0.0
    %828 = vadd.xlane.f32.xlu0 %v827
    %v829 = vpop.xlane.xlu0 %828
    %v830 = vsel %vm256, %v207, 0.0
    %831 = vadd.xlane.f32.xlu0 %v830
    %v832 = vpop.xlane.xlu0 %831
    %v833 = vsel %vm256, %v208, 0.0
    %834 = vadd.xlane.f32.xlu0 %v833
    %v835 = vpop.xlane.xlu0 %834
    %v836 = vsel %vm256, %v209, 0.0
    %837 = vadd.xlane.f32.xlu0 %v836
    %v838 = vpop.xlane.xlu0 %837
    %v839 = vsel %vm256, %v210, 0.0
    %840 = vadd.xlane.f32.xlu0 %v839
    %v841 = vpop.xlane.xlu0 %840
    %v842 = vsel %vm256, %v211, 0.0
    %843 = vadd.xlane.f32.xlu0 %v842
    %v844 = vpop.xlane.xlu0 %843
    %v845 = vsel %vm256, %v212, 0.0
    %846 = vadd.xlane.f32.xlu0 %v845
    %v847 = vpop.xlane.xlu0 %846
    %v848 = vsel %vm256, %v213, 0.0
    %849 = vadd.xlane.f32.xlu0 %v848
    %v850 = vpop.xlane.xlu0 %849
    %v851 = vsel %vm256, %v214, 0.0
    %852 = vadd.xlane.f32.xlu0 %v851
    %v853 = vpop.xlane.xlu0 %852
    %v854 = vsel %vm256, %v215, 0.0
    %855 = vadd.xlane.f32.xlu0 %v854
    %v856 = vpop.xlane.xlu0 %855
    %v857 = vsel %vm256, %v216, 0.0
    %858 = vadd.xlane.f32.xlu0 %v857
    %v859 = vpop.xlane.xlu0 %858
    %v860 = vsel %vm256, %v217, 0.0
    %861 = vadd.xlane.f32.xlu0 %v860
    %v862 = vpop.xlane.xlu0 %861
    %v863 = vsel %vm256, %v218, 0.0
    %864 = vadd.xlane.f32.xlu0 %v863
    %v865 = vpop.xlane.xlu0 %864
    %v866 = vsel %vm256, %v219, 0.0
    %867 = vadd.xlane.f32.xlu0 %v866
    %v868 = vpop.xlane.xlu0 %867
    %v869 = vsel %vm256, %v220, 0.0
    %870 = vadd.xlane.f32.xlu0 %v869
    %v871 = vpop.xlane.xlu0 %870
    %v872 = vsel %vm256, %v221, 0.0
    %873 = vadd.xlane.f32.xlu0 %v872
    %v874 = vpop.xlane.xlu0 %873
    %v875 = vsel %vm256, %v222, 0.0
    %876 = vadd.xlane.f32.xlu0 %v875
    %v877 = vpop.xlane.xlu0 %876
    %v878 = vsel %vm256, %v223, 0.0
    %879 = vadd.xlane.f32.xlu0 %v878
    %v880 = vpop.xlane.xlu0 %879
    %v881 = vsel %vm256, %v224, 0.0
    %882 = vadd.xlane.f32.xlu0 %v881
    %v883 = vpop.xlane.xlu0 %882
    %v884 = vsel %vm256, %v225, 0.0
    %885 = vadd.xlane.f32.xlu0 %v884
    %v886 = vpop.xlane.xlu0 %885
    %v887 = vsel %vm256, %v226, 0.0
    %888 = vadd.xlane.f32.xlu0 %v887
    %v889 = vpop.xlane.xlu0 %888
    %v890 = vsel %vm256, %v227, 0.0
    %891 = vadd.xlane.f32.xlu0 %v890
    %v892 = vpop.xlane.xlu0 %891
    %v893 = vsel %vm256, %v228, 0.0
    %894 = vadd.xlane.f32.xlu0 %v893
    %v895 = vpop.xlane.xlu0 %894
    %v896 = vsel %vm256, %v229, 0.0
    %897 = vadd.xlane.f32.xlu0 %v896
    %v898 = vpop.xlane.xlu0 %897
    %v899 = vsel %vm256, %v230, 0.0
    %900 = vadd.xlane.f32.xlu0 %v899
    %v901 = vpop.xlane.xlu0 %900
    %v902 = vsel %vm256, %v231, 0.0
    %903 = vadd.xlane.f32.xlu0 %v902
    %v904 = vpop.xlane.xlu0 %903
    %v905 = vsel %vm256, %v232, 0.0
    %906 = vadd.xlane.f32.xlu0 %v905
    %v907 = vpop.xlane.xlu0 %906
    %v908 = vsel %vm256, %v233, 0.0
    %909 = vadd.xlane.f32.xlu0 %v908
    %v910 = vpop.xlane.xlu0 %909
    %v911 = vsel %vm256, %v234, 0.0
    %912 = vadd.xlane.f32.xlu0 %v911
    %v913 = vpop.xlane.xlu0 %912
    %v914 = vsel %vm256, %v235, 0.0
    %915 = vadd.xlane.f32.xlu0 %v914
    %v916 = vpop.xlane.xlu0 %915
    %v917 = vsel %vm256, %v236, 0.0
    %918 = vadd.xlane.f32.xlu0 %v917
    %v919 = vpop.xlane.xlu0 %918
    %v920 = vsel %vm256, %v237, 0.0
    %921 = vadd.xlane.f32.xlu0 %v920
    %v922 = vpop.xlane.xlu0 %921
    %v923 = vsel %vm256, %v238, 0.0
    %924 = vadd.xlane.f32.xlu0 %v923
    %v925 = vpop.xlane.xlu0 %924
    %v926 = vsel %vm256, %v239, 0.0
    %927 = vadd.xlane.f32.xlu0 %v926
    %v928 = vpop.xlane.xlu0 %927
    %v929 = vsel %vm256, %v240, 0.0
    %930 = vadd.xlane.f32.xlu0 %v929
    %v931 = vpop.xlane.xlu0 %930
    %v932 = vsel %vm256, %v241, 0.0
    %933 = vadd.xlane.f32.xlu0 %v932
    %v934 = vpop.xlane.xlu0 %933
    %v935 = vsel %vm256, %v242, 0.0
    %936 = vadd.xlane.f32.xlu0 %v935
    %v937 = vpop.xlane.xlu0 %936
    %v938 = vsel %vm256, %v243, 0.0
    %939 = vadd.xlane.f32.xlu0 %v938
    %v940 = vpop.xlane.xlu0 %939
    %v941 = vsel %vm256, %v244, 0.0
    %942 = vadd.xlane.f32.xlu0 %v941
    %v943 = vpop.xlane.xlu0 %942
    %v944 = vsel %vm256, %v245, 0.0
    %945 = vadd.xlane.f32.xlu0 %v944
    %v946 = vpop.xlane.xlu0 %945
    %v947 = vsel %vm256, %v246, 0.0
    %948 = vadd.xlane.f32.xlu0 %v947
    %v949 = vpop.xlane.xlu0 %948
    %v950 = vsel %vm256, %v247, 0.0
    %951 = vadd.xlane.f32.xlu0 %v950
    %v952 = vpop.xlane.xlu0 %951
    %v953 = vsel %vm256, %v248, 0.0
    %954 = vadd.xlane.f32.xlu0 %v953
    %v955 = vpop.xlane.xlu0 %954
    %v956 = vsel %vm256, %v249, 0.0
    %957 = vadd.xlane.f32.xlu0 %v956
    %v958 = vpop.xlane.xlu0 %957
    %v959 = vsel %vm256, %v250, 0.0
    %960 = vadd.xlane.f32.xlu0 %v959
    %v961 = vpop.xlane.xlu0 %960
    %v962 = vsel %vm256, %v251, 0.0
    %963 = vadd.xlane.f32.xlu0 %v962
    %v964 = vpop.xlane.xlu0 %963
    %v965 = vsel %vm256, %v252, 0.0
    %966 = vadd.xlane.f32.xlu0 %v965
    %v967 = vpop.xlane.xlu0 %966
    %v968 = vsel %vm256, %v253, 0.0
    %969 = vadd.xlane.f32.xlu0 %v968
    %v970 = vpop.xlane.xlu0 %969
    %v971 = vsel %vm256, %v254, 0.0
    %972 = vadd.xlane.f32.xlu0 %v971
    %v973 = vpop.xlane.xlu0 %972
    %v974 = vsel %vm256, %v255, 0.0
    %975 = vadd.xlane.f32.xlu0 %v974
    %v976 = vpop.xlane.xlu0 %975
    %v977 = vmul.f32 %v259, 0.015625
    %v978 = vmul.f32 %v262, 0.015625
    %v979 = vmul.f32 %v265, 0.015625
    %v980 = vmul.f32 %v268, 0.015625
    %v981 = vmul.f32 %v271, 0.015625
    %v982 = vmul.f32 %v274, 0.015625
    %v983 = vmul.f32 %v277, 0.015625
    %v984 = vmul.f32 %v280, 0.015625
    %v985 = vmul.f32 %v283, 0.015625
    %v986 = vmul.f32 %v286, 0.015625
    %v987 = vmul.f32 %v289, 0.015625
    %v988 = vmul.f32 %v292, 0.015625
    %v989 = vmul.f32 %v295, 0.015625
    %v990 = vmul.f32 %v298, 0.015625
    %v991 = vmul.f32 %v301, 0.015625
    %v992 = vmul.f32 %v304, 0.015625
    %v993 = vmul.f32 %v307, 0.015625
    %v994 = vmul.f32 %v310, 0.015625
    %v995 = vmul.f32 %v313, 0.015625
    %v996 = vmul.f32 %v316, 0.015625
    %v997 = vmul.f32 %v319, 0.015625
    %v998 = vmul.f32 %v322, 0.015625
    %v999 = vmul.f32 %v325, 0.015625
    %v1000 = vmul.f32 %v328, 0.015625
    %v1001 = vmul.f32 %v331, 0.015625
    %v1002 = vmul.f32 %v334, 0.015625
    %v1003 = vmul.f32 %v337, 0.015625
    %v1004 = vmul.f32 %v340, 0.015625
    %v1005 = vmul.f32 %v343, 0.015625
    %v1006 = vmul.f32 %v346, 0.015625
    %v1007 = vmul.f32 %v349, 0.015625
    %v1008 = vmul.f32 %v352, 0.015625
    %v1009 = vmul.f32 %v355, 0.015625
    %v1010 = vmul.f32 %v358, 0.015625
    %v1011 = vmul.f32 %v361, 0.015625
    %v1012 = vmul.f32 %v364, 0.015625
    %v1013 = vmul.f32 %v367, 0.015625
    %v1014 = vmul.f32 %v370, 0.015625
    %v1015 = vmul.f32 %v373, 0.015625
    %v1016 = vmul.f32 %v376, 0.015625
    %v1017 = vmul.f32 %v379, 0.015625
    %v1018 = vmul.f32 %v382, 0.015625
    %v1019 = vmul.f32 %v385, 0.015625
    %v1020 = vmul.f32 %v388, 0.015625
    %v1021 = vmul.f32 %v391, 0.015625
    %v1022 = vmul.f32 %v394, 0.015625
    %v1023 = vmul.f32 %v397, 0.015625
    %v1024 = vmul.f32 %v400, 0.015625
    %v1025 = vmul.f32 %v403, 0.015625
    %v1026 = vmul.f32 %v406, 0.015625
    %v1027 = vmul.f32 %v409, 0.015625
    %v1028 = vmul.f32 %v412, 0.015625
    %v1029 = vmul.f32 %v415, 0.015625
    %v1030 = vmul.f32 %v418, 0.015625
    %v1031 = vmul.f32 %v421, 0.015625
    %v1032 = vmul.f32 %v424, 0.015625
    %v1033 = vmul.f32 %v427, 0.015625
    %v1034 = vmul.f32 %v430, 0.015625
    %v1035 = vmul.f32 %v433, 0.015625
    %v1036 = vmul.f32 %v436, 0.015625
    %v1037 = vmul.f32 %v439, 0.015625
    %v1038 = vmul.f32 %v442, 0.015625
    %v1039 = vmul.f32 %v445, 0.015625
    %v1040 = vmul.f32 %v448, 0.015625
    %v1041 = vmul.f32 %v451, 0.015625
    %v1042 = vmul.f32 %v454, 0.015625
    %v1043 = vmul.f32 %v457, 0.015625
    %v1044 = vmul.f32 %v460, 0.015625
    %v1045 = vmul.f32 %v463, 0.015625
    %v1046 = vmul.f32 %v466, 0.015625
    %v1047 = vmul.f32 %v469, 0.015625
    %v1048 = vmul.f32 %v472, 0.015625
    %v1049 = vmul.f32 %v475, 0.015625
    %v1050 = vmul.f32 %v478, 0.015625
    %v1051 = vmul.f32 %v481, 0.015625
    %v1052 = vmul.f32 %v484, 0.015625
    %v1053 = vmul.f32 %v487, 0.015625
    %v1054 = vmul.f32 %v490, 0.015625
    %v1055 = vmul.f32 %v493, 0.015625
    %v1056 = vmul.f32 %v496, 0.015625
    %v1057 = vmul.f32 %v499, 0.015625
    %v1058 = vmul.f32 %v502, 0.015625
    %v1059 = vmul.f32 %v505, 0.015625
    %v1060 = vmul.f32 %v508, 0.015625
    %v1061 = vmul.f32 %v511, 0.015625
    %v1062 = vmul.f32 %v514, 0.015625
    %v1063 = vmul.f32 %v517, 0.015625
    %v1064 = vmul.f32 %v520, 0.015625
    %v1065 = vmul.f32 %v523, 0.015625
    %v1066 = vmul.f32 %v526, 0.015625
    %v1067 = vmul.f32 %v529, 0.015625
    %v1068 = vmul.f32 %v532, 0.015625
    %v1069 = vmul.f32 %v535, 0.015625
    %v1070 = vmul.f32 %v538, 0.015625
    %v1071 = vmul.f32 %v541, 0.015625
    %v1072 = vmul.f32 %v544, 0.015625
    %v1073 = vmul.f32 %v547, 0.015625
    %v1074 = vmul.f32 %v550, 0.015625
    %v1075 = vmul.f32 %v553, 0.015625
    %v1076 = vmul.f32 %v556, 0.015625
    %v1077 = vmul.f32 %v559, 0.015625
    %v1078 = vmul.f32 %v562, 0.015625
    %v1079 = vmul.f32 %v565, 0.015625
    %v1080 = vmul.f32 %v568, 0.015625
    %v1081 = vmul.f32 %v571, 0.015625
    %v1082 = vmul.f32 %v574, 0.015625
    %v1083 = vmul.f32 %v577, 0.015625
    %v1084 = vmul.f32 %v580, 0.015625
    %v1085 = vmul.f32 %v583, 0.015625
    %v1086 = vmul.f32 %v586, 0.015625
    %v1087 = vmul.f32 %v589, 0.015625
    %v1088 = vmul.f32 %v592, 0.015625
    %v1089 = vmul.f32 %v595, 0.015625
    %v1090 = vmul.f32 %v598, 0.015625
    %v1091 = vmul.f32 %v601, 0.015625
    %v1092 = vmul.f32 %v604, 0.015625
    %v1093 = vmul.f32 %v607, 0.015625
    %v1094 = vmul.f32 %v610, 0.015625
    %v1095 = vmul.f32 %v613, 0.015625
    %v1096 = vmul.f32 %v616, 0.015625
    %v1097 = vmul.f32 %v619, 0.015625
    %v1098 = vmul.f32 %v622, 0.015625
    %v1099 = vmul.f32 %v625, 0.015625
    %v1100 = vmul.f32 %v628, 0.015625
    %v1101 = vmul.f32 %v631, 0.015625
    %v1102 = vmul.f32 %v634, 0.015625
    %v1103 = vmul.f32 %v637, 0.015625
    %v1104 = vmul.f32 %v640, 0.015625
    %v1105 = vmul.f32 %v643, 0.015625
    %v1106 = vmul.f32 %v646, 0.015625
    %v1107 = vmul.f32 %v649, 0.015625
    %v1108 = vmul.f32 %v652, 0.015625
    %v1109 = vmul.f32 %v655, 0.015625
    %v1110 = vmul.f32 %v658, 0.015625
    %v1111 = vmul.f32 %v661, 0.015625
    %v1112 = vmul.f32 %v664, 0.015625
    %v1113 = vmul.f32 %v667, 0.015625
    %v1114 = vmul.f32 %v670, 0.015625
    %v1115 = vmul.f32 %v673, 0.015625
    %v1116 = vmul.f32 %v676, 0.015625
    %v1117 = vmul.f32 %v679, 0.015625
    %v1118 = vmul.f32 %v682, 0.015625
    %v1119 = vmul.f32 %v685, 0.015625
    %v1120 = vmul.f32 %v688, 0.015625
    %v1121 = vmul.f32 %v691, 0.015625
    %v1122 = vmul.f32 %v694, 0.015625
    %v1123 = vmul.f32 %v697, 0.015625
    %v1124 = vmul.f32 %v700, 0.015625
    %v1125 = vmul.f32 %v703, 0.015625
    %v1126 = vmul.f32 %v706, 0.015625
    %v1127 = vmul.f32 %v709, 0.015625
    %v1128 = vmul.f32 %v712, 0.015625
    %v1129 = vmul.f32 %v715, 0.015625
    %v1130 = vmul.f32 %v718, 0.015625
    %v1131 = vmul.f32 %v721, 0.015625
    %v1132 = vmul.f32 %v724, 0.015625
    %v1133 = vmul.f32 %v727, 0.015625
    %v1134 = vmul.f32 %v730, 0.015625
    %v1135 = vmul.f32 %v733, 0.015625
    %v1136 = vmul.f32 %v736, 0.015625
    %v1137 = vmul.f32 %v739, 0.015625
    %v1138 = vmul.f32 %v742, 0.015625
    %v1139 = vmul.f32 %v745, 0.015625
    %v1140 = vmul.f32 %v748, 0.015625
    %v1141 = vmul.f32 %v751, 0.015625
    %v1142 = vmul.f32 %v754, 0.015625
    %v1143 = vmul.f32 %v757, 0.015625
    %v1144 = vmul.f32 %v760, 0.015625
    %v1145 = vmul.f32 %v763, 0.015625
    %v1146 = vmul.f32 %v766, 0.015625
    %v1147 = vmul.f32 %v769, 0.015625
    %v1148 = vmul.f32 %v772, 0.015625
    %v1149 = vmul.f32 %v775, 0.015625
    %v1150 = vmul.f32 %v778, 0.015625
    %v1151 = vmul.f32 %v781, 0.015625
    %v1152 = vmul.f32 %v784, 0.015625
    %v1153 = vmul.f32 %v787, 0.015625
    %v1154 = vmul.f32 %v790, 0.015625
    %v1155 = vmul.f32 %v793, 0.015625
    %v1156 = vmul.f32 %v796, 0.015625
    %v1157 = vmul.f32 %v799, 0.015625
    %v1158 = vmul.f32 %v802, 0.015625
    %v1159 = vmul.f32 %v805, 0.015625
    %v1160 = vmul.f32 %v808, 0.015625
    %v1161 = vmul.f32 %v811, 0.015625
    %v1162 = vmul.f32 %v814, 0.015625
    %v1163 = vmul.f32 %v817, 0.015625
    %v1164 = vmul.f32 %v820, 0.015625
    %v1165 = vmul.f32 %v823, 0.015625
    %v1166 = vmul.f32 %v826, 0.015625
    %v1167 = vmul.f32 %v829, 0.015625
    %v1168 = vmul.f32 %v832, 0.015625
    %v1169 = vmul.f32 %v835, 0.015625
    %v1170 = vmul.f32 %v838, 0.015625
    %v1171 = vmul.f32 %v841, 0.015625
    %v1172 = vmul.f32 %v844, 0.015625
    %v1173 = vmul.f32 %v847, 0.015625
    %v1174 = vmul.f32 %v850, 0.015625
    %v1175 = vmul.f32 %v853, 0.015625
    %v1176 = vmul.f32 %v856, 0.015625
    %v1177 = vmul.f32 %v859, 0.015625
    %v1178 = vmul.f32 %v862, 0.015625
    %v1179 = vmul.f32 %v865, 0.015625
    %v1180 = vmul.f32 %v868, 0.015625
    %v1181 = vmul.f32 %v871, 0.015625
    %v1182 = vmul.f32 %v874, 0.015625
    %v1183 = vmul.f32 %v877, 0.015625
    %v1184 = vmul.f32 %v880, 0.015625
    %v1185 = vmul.f32 %v883, 0.015625
    %v1186 = vmul.f32 %v886, 0.015625
    %v1187 = vmul.f32 %v889, 0.015625
    %v1188 = vmul.f32 %v892, 0.015625
    %v1189 = vmul.f32 %v895, 0.015625
    %v1190 = vmul.f32 %v898, 0.015625
    %v1191 = vmul.f32 %v901, 0.015625
    %v1192 = vmul.f32 %v904, 0.015625
    %v1193 = vmul.f32 %v907, 0.015625
    %v1194 = vmul.f32 %v910, 0.015625
    %v1195 = vmul.f32 %v913, 0.015625
    %v1196 = vmul.f32 %v916, 0.015625
    %v1197 = vmul.f32 %v919, 0.015625
    %v1198 = vmul.f32 %v922, 0.015625
    %v1199 = vmul.f32 %v925, 0.015625
    %v1200 = vmul.f32 %v928, 0.015625
    %v1201 = vmul.f32 %v931, 0.015625
    %v1202 = vmul.f32 %v934, 0.015625
    %v1203 = vmul.f32 %v937, 0.015625
    %v1204 = vmul.f32 %v940, 0.015625
    %v1205 = vmul.f32 %v943, 0.015625
    %v1206 = vmul.f32 %v946, 0.015625
    %v1207 = vmul.f32 %v949, 0.015625
    %v1208 = vmul.f32 %v952, 0.015625
    %v1209 = vmul.f32 %v955, 0.015625
    %v1210 = vmul.f32 %v958, 0.015625
    %v1211 = vmul.f32 %v961, 0.015625
    %v1212 = vmul.f32 %v964, 0.015625
    %v1213 = vmul.f32 %v967, 0.015625
    %v1214 = vmul.f32 %v970, 0.015625
    %v1215 = vmul.f32 %v973, 0.015625
    %v1216 = vmul.f32 %v976, 0.015625
    %v1457 = vlaneseq
    %v1458 = vand.u32 %v1457, 127
    %v1459 = vlaneseq
    %v1460 = vshrl.u32 %v1459, 7
    %v1461 = vsub.s32 %v1458, %v1460
    %v1462 = vrot.slane %v977, %v1461
    %v1463 = vadd.s32 %v1458, 4294967288
    %v1464 = vlaneseq
    %v1465 = vshrl.u32 %v1464, 7
    %v1466 = vsub.s32 %v1463, %v1465
    %v1467 = vrot.slane %v978, %v1466
    %vm1468 = vcmask 130112
    %v1469 = vsel %vm1468, %v1467, %v1462
    %v1470 = vadd.s32 %v1458, 4294967280
    %v1471 = vlaneseq
    %v1472 = vshrl.u32 %v1471, 7
    %v1473 = vsub.s32 %v1470, %v1472
    %v1474 = vrot.slane %v979, %v1473
    %vm1475 = vcmask 195712
    %v1476 = vsel %vm1475, %v1474, %v1469
    %v1477 = vadd.s32 %v1458, 4294967272
    %v1478 = vlaneseq
    %v1479 = vshrl.u32 %v1478, 7
    %v1480 = vsub.s32 %v1477, %v1479
    %v1481 = vrot.slane %v980, %v1480
    %vm1482 = vcmask 261312
    %v1483 = vsel %vm1482, %v1481, %v1476
    %v1484 = vadd.s32 %v1458, 4294967264
    %v1485 = vlaneseq
    %v1486 = vshrl.u32 %v1485, 7
    %v1487 = vsub.s32 %v1484, %v1486
    %v1488 = vrot.slane %v981, %v1487
    %vm1489 = vcmask 326912
    %v1490 = vsel %vm1489, %v1488, %v1483
    %v1491 = vadd.s32 %v1458, 4294967256
    %v1492 = vlaneseq
    %v1493 = vshrl.u32 %v1492, 7
    %v1494 = vsub.s32 %v1491, %v1493
    %v1495 = vrot.slane %v982, %v1494
    %vm1496 = vcmask 392512
    %v1497 = vsel %vm1496, %v1495, %v1490
    %v1498 = vadd.s32 %v1458, 4294967248
    %v1499 = vlaneseq
    %v1500 = vshrl.u32 %v1499, 7
    %v1501 = vsub.s32 %v1498, %v1500
    %v1502 = vrot.slane %v983, %v1501
    %vm1503 = vcmask 458112
    %v1504 = vsel %vm1503, %v1502, %v1497
    %v1505 = vadd.s32 %v1458, 4294967240
    %v1506 = vlaneseq
    %v1507 = vshrl.u32 %v1506, 7
    %v1508 = vsub.s32 %v1505, %v1507
    %v1509 = vrot.slane %v984, %v1508
    %vm1510 = vcmask 523712
    %v1511 = vsel %vm1510, %v1509, %v1504
    %v1512 = vadd.s32 %v1458, 4294967232
    %v1513 = vlaneseq
    %v1514 = vshrl.u32 %v1513, 7
    %v1515 = vsub.s32 %v1512, %v1514
    %v1516 = vrot.slane %v985, %v1515
    %vm1517 = vcmask 589312
    %v1518 = vsel %vm1517, %v1516, %v1511
    %v1519 = vadd.s32 %v1458, 4294967224
    %v1520 = vlaneseq
    %v1521 = vshrl.u32 %v1520, 7
    %v1522 = vsub.s32 %v1519, %v1521
    %v1523 = vrot.slane %v986, %v1522
    %vm1524 = vcmask 654912
    %v1525 = vsel %vm1524, %v1523, %v1518
    %v1526 = vadd.s32 %v1458, 4294967216
    %v1527 = vlaneseq
    %v1528 = vshrl.u32 %v1527, 7
    %v1529 = vsub.s32 %v1526, %v1528
    %v1530 = vrot.slane %v987, %v1529
    %vm1531 = vcmask 720512
    %v1532 = vsel %vm1531, %v1530, %v1525
    %v1533 = vadd.s32 %v1458, 4294967208
    %v1534 = vlaneseq
    %v1535 = vshrl.u32 %v1534, 7
    %v1536 = vsub.s32 %v1533, %v1535
    %v1537 = vrot.slane %v988, %v1536
    %vm1538 = vcmask 786112
    %v1539 = vsel %vm1538, %v1537, %v1532
    %v1540 = vadd.s32 %v1458, 4294967200
    %v1541 = vlaneseq
    %v1542 = vshrl.u32 %v1541, 7
    %v1543 = vsub.s32 %v1540, %v1542
    %v1544 = vrot.slane %v989, %v1543
    %vm1545 = vcmask 851712
    %v1546 = vsel %vm1545, %v1544, %v1539
    %v1547 = vadd.s32 %v1458, 4294967192
    %v1548 = vlaneseq
    %v1549 = vshrl.u32 %v1548, 7
    %v1550 = vsub.s32 %v1547, %v1549
    %v1551 = vrot.slane %v990, %v1550
    %vm1552 = vcmask 917312
    %v1553 = vsel %vm1552, %v1551, %v1546
    %v1554 = vadd.s32 %v1458, 4294967184
    %v1555 = vlaneseq
    %v1556 = vshrl.u32 %v1555, 7
    %v1557 = vsub.s32 %v1554, %v1556
    %v1558 = vrot.slane %v991, %v1557
    %vm1559 = vcmask 982912
    %v1560 = vsel %vm1559, %v1558, %v1553
    %v1561 = vadd.s32 %v1458, 4294967176
    %v1562 = vlaneseq
    %v1563 = vshrl.u32 %v1562, 7
    %v1564 = vsub.s32 %v1561, %v1563
    %v1565 = vrot.slane %v992, %v1564
    %vm1566 = vcmask 1048512
    %v1567 = vsel %vm1566, %v1565, %v1560
    %v1568 = vlaneseq
    %v1569 = vshrl.u32 %v1568, 7
    %v1570 = vsub.s32 %v1458, %v1569
    %v1571 = vrot.slane %v993, %v1570
    %v1572 = vlaneseq
    %v1573 = vshrl.u32 %v1572, 7
    %v1574 = vsub.s32 %v1463, %v1573
    %v1575 = vrot.slane %v994, %v1574
    %v1576 = vsel %vm1468, %v1575, %v1571
    %v1577 = vlaneseq
    %v1578 = vshrl.u32 %v1577, 7
    %v1579 = vsub.s32 %v1470, %v1578
    %v1580 = vrot.slane %v995, %v1579
    %v1581 = vsel %vm1475, %v1580, %v1576
    %v1582 = vlaneseq
    %v1583 = vshrl.u32 %v1582, 7
    %v1584 = vsub.s32 %v1477, %v1583
    %v1585 = vrot.slane %v996, %v1584
    %v1586 = vsel %vm1482, %v1585, %v1581
    %v1587 = vlaneseq
    %v1588 = vshrl.u32 %v1587, 7
    %v1589 = vsub.s32 %v1484, %v1588
    %v1590 = vrot.slane %v997, %v1589
    %v1591 = vsel %vm1489, %v1590, %v1586
    %v1592 = vlaneseq
    %v1593 = vshrl.u32 %v1592, 7
    %v1594 = vsub.s32 %v1491, %v1593
    %v1595 = vrot.slane %v998, %v1594
    %v1596 = vsel %vm1496, %v1595, %v1591
    %v1597 = vlaneseq
    %v1598 = vshrl.u32 %v1597, 7
    %v1599 = vsub.s32 %v1498, %v1598
    %v1600 = vrot.slane %v999, %v1599
    %v1601 = vsel %vm1503, %v1600, %v1596
    %v1602 = vlaneseq
    %v1603 = vshrl.u32 %v1602, 7
    %v1604 = vsub.s32 %v1505, %v1603
    %v1605 = vrot.slane %v1000, %v1604
    %v1606 = vsel %vm1510, %v1605, %v1601
    %v1607 = vlaneseq
    %v1608 = vshrl.u32 %v1607, 7
    %v1609 = vsub.s32 %v1512, %v1608
    %v1610 = vrot.slane %v1001, %v1609
    %v1611 = vsel %vm1517, %v1610, %v1606
    %v1612 = vlaneseq
    %v1613 = vshrl.u32 %v1612, 7
    %v1614 = vsub.s32 %v1519, %v1613
    %v1615 = vrot.slane %v1002, %v1614
    %v1616 = vsel %vm1524, %v1615, %v1611
    %v1617 = vlaneseq
    %v1618 = vshrl.u32 %v1617, 7
    %v1619 = vsub.s32 %v1526, %v1618
    %v1620 = vrot.slane %v1003, %v1619
    %v1621 = vsel %vm1531, %v1620, %v1616
    %v1622 = vlaneseq
    %v1623 = vshrl.u32 %v1622, 7
    %v1624 = vsub.s32 %v1533, %v1623
    %v1625 = vrot.slane %v1004, %v1624
    %v1626 = vsel %vm1538, %v1625, %v1621
    %v1627 = vlaneseq
    %v1628 = vshrl.u32 %v1627, 7
    %v1629 = vsub.s32 %v1540, %v1628
    %v1630 = vrot.slane %v1005, %v1629
    %v1631 = vsel %vm1545, %v1630, %v1626
    %v1632 = vlaneseq
    %v1633 = vshrl.u32 %v1632, 7
    %v1634 = vsub.s32 %v1547, %v1633
    %v1635 = vrot.slane %v1006, %v1634
    %v1636 = vsel %vm1552, %v1635, %v1631
    %v1637 = vlaneseq
    %v1638 = vshrl.u32 %v1637, 7
    %v1639 = vsub.s32 %v1554, %v1638
    %v1640 = vrot.slane %v1007, %v1639
    %v1641 = vsel %vm1559, %v1640, %v1636
    %v1642 = vlaneseq
    %v1643 = vshrl.u32 %v1642, 7
    %v1644 = vsub.s32 %v1561, %v1643
    %v1645 = vrot.slane %v1008, %v1644
    %v1646 = vsel %vm1566, %v1645, %v1641
    %v1647 = vlaneseq
    %v1648 = vshrl.u32 %v1647, 7
    %v1649 = vsub.s32 %v1458, %v1648
    %v1650 = vrot.slane %v1009, %v1649
    %v1651 = vlaneseq
    %v1652 = vshrl.u32 %v1651, 7
    %v1653 = vsub.s32 %v1463, %v1652
    %v1654 = vrot.slane %v1010, %v1653
    %v1655 = vsel %vm1468, %v1654, %v1650
    %v1656 = vlaneseq
    %v1657 = vshrl.u32 %v1656, 7
    %v1658 = vsub.s32 %v1470, %v1657
    %v1659 = vrot.slane %v1011, %v1658
    %v1660 = vsel %vm1475, %v1659, %v1655
    %v1661 = vlaneseq
    %v1662 = vshrl.u32 %v1661, 7
    %v1663 = vsub.s32 %v1477, %v1662
    %v1664 = vrot.slane %v1012, %v1663
    %v1665 = vsel %vm1482, %v1664, %v1660
    %v1666 = vlaneseq
    %v1667 = vshrl.u32 %v1666, 7
    %v1668 = vsub.s32 %v1484, %v1667
    %v1669 = vrot.slane %v1013, %v1668
    %v1670 = vsel %vm1489, %v1669, %v1665
    %v1671 = vlaneseq
    %v1672 = vshrl.u32 %v1671, 7
    %v1673 = vsub.s32 %v1491, %v1672
    %v1674 = vrot.slane %v1014, %v1673
    %v1675 = vsel %vm1496, %v1674, %v1670
    %v1676 = vlaneseq
    %v1677 = vshrl.u32 %v1676, 7
    %v1678 = vsub.s32 %v1498, %v1677
    %v1679 = vrot.slane %v1015, %v1678
    %v1680 = vsel %vm1503, %v1679, %v1675
    %v1681 = vlaneseq
    %v1682 = vshrl.u32 %v1681, 7
    %v1683 = vsub.s32 %v1505, %v1682
    %v1684 = vrot.slane %v1016, %v1683
    %v1685 = vsel %vm1510, %v1684, %v1680
    %v1686 = vlaneseq
    %v1687 = vshrl.u32 %v1686, 7
    %v1688 = vsub.s32 %v1512, %v1687
    %v1689 = vrot.slane %v1017, %v1688
    %v1690 = vsel %vm1517, %v1689, %v1685
    %v1691 = vlaneseq
    %v1692 = vshrl.u32 %v1691, 7
    %v1693 = vsub.s32 %v1519, %v1692
    %v1694 = vrot.slane %v1018, %v1693
    %v1695 = vsel %vm1524, %v1694, %v1690
    %v1696 = vlaneseq
    %v1697 = vshrl.u32 %v1696, 7
    %v1698 = vsub.s32 %v1526, %v1697
    %v1699 = vrot.slane %v1019, %v1698
    %v1700 = vsel %vm1531, %v1699, %v1695
    %v1701 = vlaneseq
    %v1702 = vshrl.u32 %v1701, 7
    %v1703 = vsub.s32 %v1533, %v1702
    %v1704 = vrot.slane %v1020, %v1703
    %v1705 = vsel %vm1538, %v1704, %v1700
    %v1706 = vlaneseq
    %v1707 = vshrl.u32 %v1706, 7
    %v1708 = vsub.s32 %v1540, %v1707
    %v1709 = vrot.slane %v1021, %v1708
    %v1710 = vsel %vm1545, %v1709, %v1705
    %v1711 = vlaneseq
    %v1712 = vshrl.u32 %v1711, 7
    %v1713 = vsub.s32 %v1547, %v1712
    %v1714 = vrot.slane %v1022, %v1713
    %v1715 = vsel %vm1552, %v1714, %v1710
    %v1716 = vlaneseq
    %v1717 = vshrl.u32 %v1716, 7
    %v1718 = vsub.s32 %v1554, %v1717
    %v1719 = vrot.slane %v1023, %v1718
    %v1720 = vsel %vm1559, %v1719, %v1715
    %v1721 = vlaneseq
    %v1722 = vshrl.u32 %v1721, 7
    %v1723 = vsub.s32 %v1561, %v1722
    %v1724 = vrot.slane %v1024, %v1723
    %v1725 = vsel %vm1566, %v1724, %v1720
    %v1726 = vlaneseq
    %v1727 = vshrl.u32 %v1726, 7
    %v1728 = vsub.s32 %v1458, %v1727
    %v1729 = vrot.slane %v1025, %v1728
    %v1730 = vlaneseq
    %v1731 = vshrl.u32 %v1730, 7
    %v1732 = vsub.s32 %v1463, %v1731
    %v1733 = vrot.slane %v1026, %v1732
    %v1734 = vsel %vm1468, %v1733, %v1729
    %v1735 = vlaneseq
    %v1736 = vshrl.u32 %v1735, 7
    %v1737 = vsub.s32 %v1470, %v1736
    %v1738 = vrot.slane %v1027, %v1737
    %v1739 = vsel %vm1475, %v1738, %v1734
    %v1740 = vlaneseq
    %v1741 = vshrl.u32 %v1740, 7
    %v1742 = vsub.s32 %v1477, %v1741
    %v1743 = vrot.slane %v1028, %v1742
    %v1744 = vsel %vm1482, %v1743, %v1739
    %v1745 = vlaneseq
    %v1746 = vshrl.u32 %v1745, 7
    %v1747 = vsub.s32 %v1484, %v1746
    %v1748 = vrot.slane %v1029, %v1747
    %v1749 = vsel %vm1489, %v1748, %v1744
    %v1750 = vlaneseq
    %v1751 = vshrl.u32 %v1750, 7
    %v1752 = vsub.s32 %v1491, %v1751
    %v1753 = vrot.slane %v1030, %v1752
    %v1754 = vsel %vm1496, %v1753, %v1749
    %v1755 = vlaneseq
    %v1756 = vshrl.u32 %v1755, 7
    %v1757 = vsub.s32 %v1498, %v1756
    %v1758 = vrot.slane %v1031, %v1757
    %v1759 = vsel %vm1503, %v1758, %v1754
    %v1760 = vlaneseq
    %v1761 = vshrl.u32 %v1760, 7
    %v1762 = vsub.s32 %v1505, %v1761
    %v1763 = vrot.slane %v1032, %v1762
    %v1764 = vsel %vm1510, %v1763, %v1759
    %v1765 = vlaneseq
    %v1766 = vshrl.u32 %v1765, 7
    %v1767 = vsub.s32 %v1512, %v1766
    %v1768 = vrot.slane %v1033, %v1767
    %v1769 = vsel %vm1517, %v1768, %v1764
    %v1770 = vlaneseq
    %v1771 = vshrl.u32 %v1770, 7
    %v1772 = vsub.s32 %v1519, %v1771
    %v1773 = vrot.slane %v1034, %v1772
    %v1774 = vsel %vm1524, %v1773, %v1769
    %v1775 = vlaneseq
    %v1776 = vshrl.u32 %v1775, 7
    %v1777 = vsub.s32 %v1526, %v1776
    %v1778 = vrot.slane %v1035, %v1777
    %v1779 = vsel %vm1531, %v1778, %v1774
    %v1780 = vlaneseq
    %v1781 = vshrl.u32 %v1780, 7
    %v1782 = vsub.s32 %v1533, %v1781
    %v1783 = vrot.slane %v1036, %v1782
    %v1784 = vsel %vm1538, %v1783, %v1779
    %v1785 = vlaneseq
    %v1786 = vshrl.u32 %v1785, 7
    %v1787 = vsub.s32 %v1540, %v1786
    %v1788 = vrot.slane %v1037, %v1787
    %v1789 = vsel %vm1545, %v1788, %v1784
    %v1790 = vlaneseq
    %v1791 = vshrl.u32 %v1790, 7
    %v1792 = vsub.s32 %v1547, %v1791
    %v1793 = vrot.slane %v1038, %v1792
    %v1794 = vsel %vm1552, %v1793, %v1789
    %v1795 = vlaneseq
    %v1796 = vshrl.u32 %v1795, 7
    %v1797 = vsub.s32 %v1554, %v1796
    %v1798 = vrot.slane %v1039, %v1797
    %v1799 = vsel %vm1559, %v1798, %v1794
    %v1800 = vlaneseq
    %v1801 = vshrl.u32 %v1800, 7
    %v1802 = vsub.s32 %v1561, %v1801
    %v1803 = vrot.slane %v1040, %v1802
    %v1804 = vsel %vm1566, %v1803, %v1799
    %v1805 = vlaneseq
    %v1806 = vshrl.u32 %v1805, 7
    %v1807 = vsub.s32 %v1458, %v1806
    %v1808 = vrot.slane %v1041, %v1807
    %v1809 = vlaneseq
    %v1810 = vshrl.u32 %v1809, 7
    %v1811 = vsub.s32 %v1463, %v1810
    %v1812 = vrot.slane %v1042, %v1811
    %v1813 = vsel %vm1468, %v1812, %v1808
    %v1814 = vlaneseq
    %v1815 = vshrl.u32 %v1814, 7
    %v1816 = vsub.s32 %v1470, %v1815
    %v1817 = vrot.slane %v1043, %v1816
    %v1818 = vsel %vm1475, %v1817, %v1813
    %v1819 = vlaneseq
    %v1820 = vshrl.u32 %v1819, 7
    %v1821 = vsub.s32 %v1477, %v1820
    %v1822 = vrot.slane %v1044, %v1821
    %v1823 = vsel %vm1482, %v1822, %v1818
    %v1824 = vlaneseq
    %v1825 = vshrl.u32 %v1824, 7
    %v1826 = vsub.s32 %v1484, %v1825
    %v1827 = vrot.slane %v1045, %v1826
    %v1828 = vsel %vm1489, %v1827, %v1823
    %v1829 = vlaneseq
    %v1830 = vshrl.u32 %v1829, 7
    %v1831 = vsub.s32 %v1491, %v1830
    %v1832 = vrot.slane %v1046, %v1831
    %v1833 = vsel %vm1496, %v1832, %v1828
    %v1834 = vlaneseq
    %v1835 = vshrl.u32 %v1834, 7
    %v1836 = vsub.s32 %v1498, %v1835
    %v1837 = vrot.slane %v1047, %v1836
    %v1838 = vsel %vm1503, %v1837, %v1833
    %v1839 = vlaneseq
    %v1840 = vshrl.u32 %v1839, 7
    %v1841 = vsub.s32 %v1505, %v1840
    %v1842 = vrot.slane %v1048, %v1841
    %v1843 = vsel %vm1510, %v1842, %v1838
    %v1844 = vlaneseq
    %v1845 = vshrl.u32 %v1844, 7
    %v1846 = vsub.s32 %v1512, %v1845
    %v1847 = vrot.slane %v1049, %v1846
    %v1848 = vsel %vm1517, %v1847, %v1843
    %v1849 = vlaneseq
    %v1850 = vshrl.u32 %v1849, 7
    %v1851 = vsub.s32 %v1519, %v1850
    %v1852 = vrot.slane %v1050, %v1851
    %v1853 = vsel %vm1524, %v1852, %v1848
    %v1854 = vlaneseq
    %v1855 = vshrl.u32 %v1854, 7
    %v1856 = vsub.s32 %v1526, %v1855
    %v1857 = vrot.slane %v1051, %v1856
    %v1858 = vsel %vm1531, %v1857, %v1853
    %v1859 = vlaneseq
    %v1860 = vshrl.u32 %v1859, 7
    %v1861 = vsub.s32 %v1533, %v1860
    %v1862 = vrot.slane %v1052, %v1861
    %v1863 = vsel %vm1538, %v1862, %v1858
    %v1864 = vlaneseq
    %v1865 = vshrl.u32 %v1864, 7
    %v1866 = vsub.s32 %v1540, %v1865
    %v1867 = vrot.slane %v1053, %v1866
    %v1868 = vsel %vm1545, %v1867, %v1863
    %v1869 = vlaneseq
    %v1870 = vshrl.u32 %v1869, 7
    %v1871 = vsub.s32 %v1547, %v1870
    %v1872 = vrot.slane %v1054, %v1871
    %v1873 = vsel %vm1552, %v1872, %v1868
    %v1874 = vlaneseq
    %v1875 = vshrl.u32 %v1874, 7
    %v1876 = vsub.s32 %v1554, %v1875
    %v1877 = vrot.slane %v1055, %v1876
    %v1878 = vsel %vm1559, %v1877, %v1873
    %v1879 = vlaneseq
    %v1880 = vshrl.u32 %v1879, 7
    %v1881 = vsub.s32 %v1561, %v1880
    %v1882 = vrot.slane %v1056, %v1881
    %v1883 = vsel %vm1566, %v1882, %v1878
    %v1884 = vlaneseq
    %v1885 = vshrl.u32 %v1884, 7
    %v1886 = vsub.s32 %v1458, %v1885
    %v1887 = vrot.slane %v1057, %v1886
    %v1888 = vlaneseq
    %v1889 = vshrl.u32 %v1888, 7
    %v1890 = vsub.s32 %v1463, %v1889
    %v1891 = vrot.slane %v1058, %v1890
    %v1892 = vsel %vm1468, %v1891, %v1887
    %v1893 = vlaneseq
    %v1894 = vshrl.u32 %v1893, 7
    %v1895 = vsub.s32 %v1470, %v1894
    %v1896 = vrot.slane %v1059, %v1895
    %v1897 = vsel %vm1475, %v1896, %v1892
    %v1898 = vlaneseq
    %v1899 = vshrl.u32 %v1898, 7
    %v1900 = vsub.s32 %v1477, %v1899
    %v1901 = vrot.slane %v1060, %v1900
    %v1902 = vsel %vm1482, %v1901, %v1897
    %v1903 = vlaneseq
    %v1904 = vshrl.u32 %v1903, 7
    %v1905 = vsub.s32 %v1484, %v1904
    %v1906 = vrot.slane %v1061, %v1905
    %v1907 = vsel %vm1489, %v1906, %v1902
    %v1908 = vlaneseq
    %v1909 = vshrl.u32 %v1908, 7
    %v1910 = vsub.s32 %v1491, %v1909
    %v1911 = vrot.slane %v1062, %v1910
    %v1912 = vsel %vm1496, %v1911, %v1907
    %v1913 = vlaneseq
    %v1914 = vshrl.u32 %v1913, 7
    %v1915 = vsub.s32 %v1498, %v1914
    %v1916 = vrot.slane %v1063, %v1915
    %v1917 = vsel %vm1503, %v1916, %v1912
    %v1918 = vlaneseq
    %v1919 = vshrl.u32 %v1918, 7
    %v1920 = vsub.s32 %v1505, %v1919
    %v1921 = vrot.slane %v1064, %v1920
    %v1922 = vsel %vm1510, %v1921, %v1917
    %v1923 = vlaneseq
    %v1924 = vshrl.u32 %v1923, 7
    %v1925 = vsub.s32 %v1512, %v1924
    %v1926 = vrot.slane %v1065, %v1925
    %v1927 = vsel %vm1517, %v1926, %v1922
    %v1928 = vlaneseq
    %v1929 = vshrl.u32 %v1928, 7
    %v1930 = vsub.s32 %v1519, %v1929
    %v1931 = vrot.slane %v1066, %v1930
    %v1932 = vsel %vm1524, %v1931, %v1927
    %v1933 = vlaneseq
    %v1934 = vshrl.u32 %v1933, 7
    %v1935 = vsub.s32 %v1526, %v1934
    %v1936 = vrot.slane %v1067, %v1935
    %v1937 = vsel %vm1531, %v1936, %v1932
    %v1938 = vlaneseq
    %v1939 = vshrl.u32 %v1938, 7
    %v1940 = vsub.s32 %v1533, %v1939
    %v1941 = vrot.slane %v1068, %v1940
    %v1942 = vsel %vm1538, %v1941, %v1937
    %v1943 = vlaneseq
    %v1944 = vshrl.u32 %v1943, 7
    %v1945 = vsub.s32 %v1540, %v1944
    %v1946 = vrot.slane %v1069, %v1945
    %v1947 = vsel %vm1545, %v1946, %v1942
    %v1948 = vlaneseq
    %v1949 = vshrl.u32 %v1948, 7
    %v1950 = vsub.s32 %v1547, %v1949
    %v1951 = vrot.slane %v1070, %v1950
    %v1952 = vsel %vm1552, %v1951, %v1947
    %v1953 = vlaneseq
    %v1954 = vshrl.u32 %v1953, 7
    %v1955 = vsub.s32 %v1554, %v1954
    %v1956 = vrot.slane %v1071, %v1955
    %v1957 = vsel %vm1559, %v1956, %v1952
    %v1958 = vlaneseq
    %v1959 = vshrl.u32 %v1958, 7
    %v1960 = vsub.s32 %v1561, %v1959
    %v1961 = vrot.slane %v1072, %v1960
    %v1962 = vsel %vm1566, %v1961, %v1957
    %v1963 = vlaneseq
    %v1964 = vshrl.u32 %v1963, 7
    %v1965 = vsub.s32 %v1458, %v1964
    %v1966 = vrot.slane %v1073, %v1965
    %v1967 = vlaneseq
    %v1968 = vshrl.u32 %v1967, 7
    %v1969 = vsub.s32 %v1463, %v1968
    %v1970 = vrot.slane %v1074, %v1969
    %v1971 = vsel %vm1468, %v1970, %v1966
    %v1972 = vlaneseq
    %v1973 = vshrl.u32 %v1972, 7
    %v1974 = vsub.s32 %v1470, %v1973
    %v1975 = vrot.slane %v1075, %v1974
    %v1976 = vsel %vm1475, %v1975, %v1971
    %v1977 = vlaneseq
    %v1978 = vshrl.u32 %v1977, 7
    %v1979 = vsub.s32 %v1477, %v1978
    %v1980 = vrot.slane %v1076, %v1979
    %v1981 = vsel %vm1482, %v1980, %v1976
    %v1982 = vlaneseq
    %v1983 = vshrl.u32 %v1982, 7
    %v1984 = vsub.s32 %v1484, %v1983
    %v1985 = vrot.slane %v1077, %v1984
    %v1986 = vsel %vm1489, %v1985, %v1981
    %v1987 = vlaneseq
    %v1988 = vshrl.u32 %v1987, 7
    %v1989 = vsub.s32 %v1491, %v1988
    %v1990 = vrot.slane %v1078, %v1989
    %v1991 = vsel %vm1496, %v1990, %v1986
    %v1992 = vlaneseq
    %v1993 = vshrl.u32 %v1992, 7
    %v1994 = vsub.s32 %v1498, %v1993
    %v1995 = vrot.slane %v1079, %v1994
    %v1996 = vsel %vm1503, %v1995, %v1991
    %v1997 = vlaneseq
    %v1998 = vshrl.u32 %v1997, 7
    %v1999 = vsub.s32 %v1505, %v1998
    %v2000 = vrot.slane %v1080, %v1999
    %v2001 = vsel %vm1510, %v2000, %v1996
    %v2002 = vlaneseq
    %v2003 = vshrl.u32 %v2002, 7
    %v2004 = vsub.s32 %v1512, %v2003
    %v2005 = vrot.slane %v1081, %v2004
    %v2006 = vsel %vm1517, %v2005, %v2001
    %v2007 = vlaneseq
    %v2008 = vshrl.u32 %v2007, 7
    %v2009 = vsub.s32 %v1519, %v2008
    %v2010 = vrot.slane %v1082, %v2009
    %v2011 = vsel %vm1524, %v2010, %v2006
    %v2012 = vlaneseq
    %v2013 = vshrl.u32 %v2012, 7
    %v2014 = vsub.s32 %v1526, %v2013
    %v2015 = vrot.slane %v1083, %v2014
    %v2016 = vsel %vm1531, %v2015, %v2011
    %v2017 = vlaneseq
    %v2018 = vshrl.u32 %v2017, 7
    %v2019 = vsub.s32 %v1533, %v2018
    %v2020 = vrot.slane %v1084, %v2019
    %v2021 = vsel %vm1538, %v2020, %v2016
    %v2022 = vlaneseq
    %v2023 = vshrl.u32 %v2022, 7
    %v2024 = vsub.s32 %v1540, %v2023
    %v2025 = vrot.slane %v1085, %v2024
    %v2026 = vsel %vm1545, %v2025, %v2021
    %v2027 = vlaneseq
    %v2028 = vshrl.u32 %v2027, 7
    %v2029 = vsub.s32 %v1547, %v2028
    %v2030 = vrot.slane %v1086, %v2029
    %v2031 = vsel %vm1552, %v2030, %v2026
    %v2032 = vlaneseq
    %v2033 = vshrl.u32 %v2032, 7
    %v2034 = vsub.s32 %v1554, %v2033
    %v2035 = vrot.slane %v1087, %v2034
    %v2036 = vsel %vm1559, %v2035, %v2031
    %v2037 = vlaneseq
    %v2038 = vshrl.u32 %v2037, 7
    %v2039 = vsub.s32 %v1561, %v2038
    %v2040 = vrot.slane %v1088, %v2039
    %v2041 = vsel %vm1566, %v2040, %v2036
    %v2042 = vlaneseq
    %v2043 = vshrl.u32 %v2042, 7
    %v2044 = vsub.s32 %v1458, %v2043
    %v2045 = vrot.slane %v1089, %v2044
    %v2046 = vlaneseq
    %v2047 = vshrl.u32 %v2046, 7
    %v2048 = vsub.s32 %v1463, %v2047
    %v2049 = vrot.slane %v1090, %v2048
    %v2050 = vsel %vm1468, %v2049, %v2045
    %v2051 = vlaneseq
    %v2052 = vshrl.u32 %v2051, 7
    %v2053 = vsub.s32 %v1470, %v2052
    %v2054 = vrot.slane %v1091, %v2053
    %v2055 = vsel %vm1475, %v2054, %v2050
    %v2056 = vlaneseq
    %v2057 = vshrl.u32 %v2056, 7
    %v2058 = vsub.s32 %v1477, %v2057
    %v2059 = vrot.slane %v1092, %v2058
    %v2060 = vsel %vm1482, %v2059, %v2055
    %v2061 = vlaneseq
    %v2062 = vshrl.u32 %v2061, 7
    %v2063 = vsub.s32 %v1484, %v2062
    %v2064 = vrot.slane %v1093, %v2063
    %v2065 = vsel %vm1489, %v2064, %v2060
    %v2066 = vlaneseq
    %v2067 = vshrl.u32 %v2066, 7
    %v2068 = vsub.s32 %v1491, %v2067
    %v2069 = vrot.slane %v1094, %v2068
    %v2070 = vsel %vm1496, %v2069, %v2065
    %v2071 = vlaneseq
    %v2072 = vshrl.u32 %v2071, 7
    %v2073 = vsub.s32 %v1498, %v2072
    %v2074 = vrot.slane %v1095, %v2073
    %v2075 = vsel %vm1503, %v2074, %v2070
    %v2076 = vlaneseq
    %v2077 = vshrl.u32 %v2076, 7
    %v2078 = vsub.s32 %v1505, %v2077
    %v2079 = vrot.slane %v1096, %v2078
    %v2080 = vsel %vm1510, %v2079, %v2075
    %v2081 = vlaneseq
    %v2082 = vshrl.u32 %v2081, 7
    %v2083 = vsub.s32 %v1458, %v2082
    %v2084 = vrot.slane %v1097, %v2083
    %v2085 = vlaneseq
    %v2086 = vshrl.u32 %v2085, 7
    %v2087 = vsub.s32 %v1463, %v2086
    %v2088 = vrot.slane %v1098, %v2087
    %v2089 = vsel %vm1468, %v2088, %v2084
    %v2090 = vlaneseq
    %v2091 = vshrl.u32 %v2090, 7
    %v2092 = vsub.s32 %v1470, %v2091
    %v2093 = vrot.slane %v1099, %v2092
    %v2094 = vsel %vm1475, %v2093, %v2089
    %v2095 = vlaneseq
    %v2096 = vshrl.u32 %v2095, 7
    %v2097 = vsub.s32 %v1477, %v2096
    %v2098 = vrot.slane %v1100, %v2097
    %v2099 = vsel %vm1482, %v2098, %v2094
    %v2100 = vlaneseq
    %v2101 = vshrl.u32 %v2100, 7
    %v2102 = vsub.s32 %v1484, %v2101
    %v2103 = vrot.slane %v1101, %v2102
    %v2104 = vsel %vm1489, %v2103, %v2099
    %v2105 = vlaneseq
    %v2106 = vshrl.u32 %v2105, 7
    %v2107 = vsub.s32 %v1491, %v2106
    %v2108 = vrot.slane %v1102, %v2107
    %v2109 = vsel %vm1496, %v2108, %v2104
    %v2110 = vlaneseq
    %v2111 = vshrl.u32 %v2110, 7
    %v2112 = vsub.s32 %v1498, %v2111
    %v2113 = vrot.slane %v1103, %v2112
    %v2114 = vsel %vm1503, %v2113, %v2109
    %v2115 = vlaneseq
    %v2116 = vshrl.u32 %v2115, 7
    %v2117 = vsub.s32 %v1505, %v2116
    %v2118 = vrot.slane %v1104, %v2117
    %v2119 = vsel %vm1510, %v2118, %v2114
    %v2120 = vlaneseq
    %v2121 = vshrl.u32 %v2120, 7
    %v2122 = vsub.s32 %v1512, %v2121
    %v2123 = vrot.slane %v1105, %v2122
    %v2124 = vsel %vm1517, %v2123, %v2119
    %v2125 = vlaneseq
    %v2126 = vshrl.u32 %v2125, 7
    %v2127 = vsub.s32 %v1519, %v2126
    %v2128 = vrot.slane %v1106, %v2127
    %v2129 = vsel %vm1524, %v2128, %v2124
    %v2130 = vlaneseq
    %v2131 = vshrl.u32 %v2130, 7
    %v2132 = vsub.s32 %v1526, %v2131
    %v2133 = vrot.slane %v1107, %v2132
    %v2134 = vsel %vm1531, %v2133, %v2129
    %v2135 = vlaneseq
    %v2136 = vshrl.u32 %v2135, 7
    %v2137 = vsub.s32 %v1533, %v2136
    %v2138 = vrot.slane %v1108, %v2137
    %v2139 = vsel %vm1538, %v2138, %v2134
    %v2140 = vlaneseq
    %v2141 = vshrl.u32 %v2140, 7
    %v2142 = vsub.s32 %v1540, %v2141
    %v2143 = vrot.slane %v1109, %v2142
    %v2144 = vsel %vm1545, %v2143, %v2139
    %v2145 = vlaneseq
    %v2146 = vshrl.u32 %v2145, 7
    %v2147 = vsub.s32 %v1547, %v2146
    %v2148 = vrot.slane %v1110, %v2147
    %v2149 = vsel %vm1552, %v2148, %v2144
    %v2150 = vlaneseq
    %v2151 = vshrl.u32 %v2150, 7
    %v2152 = vsub.s32 %v1554, %v2151
    %v2153 = vrot.slane %v1111, %v2152
    %v2154 = vsel %vm1559, %v2153, %v2149
    %v2155 = vlaneseq
    %v2156 = vshrl.u32 %v2155, 7
    %v2157 = vsub.s32 %v1561, %v2156
    %v2158 = vrot.slane %v1112, %v2157
    %v2159 = vsel %vm1566, %v2158, %v2154
    %v2160 = vlaneseq
    %v2161 = vshrl.u32 %v2160, 7
    %v2162 = vsub.s32 %v1458, %v2161
    %v2163 = vrot.slane %v1113, %v2162
    %v2164 = vlaneseq
    %v2165 = vshrl.u32 %v2164, 7
    %v2166 = vsub.s32 %v1463, %v2165
    %v2167 = vrot.slane %v1114, %v2166
    %v2168 = vsel %vm1468, %v2167, %v2163
    %v2169 = vlaneseq
    %v2170 = vshrl.u32 %v2169, 7
    %v2171 = vsub.s32 %v1470, %v2170
    %v2172 = vrot.slane %v1115, %v2171
    %v2173 = vsel %vm1475, %v2172, %v2168
    %v2174 = vlaneseq
    %v2175 = vshrl.u32 %v2174, 7
    %v2176 = vsub.s32 %v1477, %v2175
    %v2177 = vrot.slane %v1116, %v2176
    %v2178 = vsel %vm1482, %v2177, %v2173
    %v2179 = vlaneseq
    %v2180 = vshrl.u32 %v2179, 7
    %v2181 = vsub.s32 %v1484, %v2180
    %v2182 = vrot.slane %v1117, %v2181
    %v2183 = vsel %vm1489, %v2182, %v2178
    %v2184 = vlaneseq
    %v2185 = vshrl.u32 %v2184, 7
    %v2186 = vsub.s32 %v1491, %v2185
    %v2187 = vrot.slane %v1118, %v2186
    %v2188 = vsel %vm1496, %v2187, %v2183
    %v2189 = vlaneseq
    %v2190 = vshrl.u32 %v2189, 7
    %v2191 = vsub.s32 %v1498, %v2190
    %v2192 = vrot.slane %v1119, %v2191
    %v2193 = vsel %vm1503, %v2192, %v2188
    %v2194 = vlaneseq
    %v2195 = vshrl.u32 %v2194, 7
    %v2196 = vsub.s32 %v1505, %v2195
    %v2197 = vrot.slane %v1120, %v2196
    %v2198 = vsel %vm1510, %v2197, %v2193
    %v2199 = vlaneseq
    %v2200 = vshrl.u32 %v2199, 7
    %v2201 = vsub.s32 %v1512, %v2200
    %v2202 = vrot.slane %v1121, %v2201
    %v2203 = vsel %vm1517, %v2202, %v2198
    %v2204 = vlaneseq
    %v2205 = vshrl.u32 %v2204, 7
    %v2206 = vsub.s32 %v1519, %v2205
    %v2207 = vrot.slane %v1122, %v2206
    %v2208 = vsel %vm1524, %v2207, %v2203
    %v2209 = vlaneseq
    %v2210 = vshrl.u32 %v2209, 7
    %v2211 = vsub.s32 %v1526, %v2210
    %v2212 = vrot.slane %v1123, %v2211
    %v2213 = vsel %vm1531, %v2212, %v2208
    %v2214 = vlaneseq
    %v2215 = vshrl.u32 %v2214, 7
    %v2216 = vsub.s32 %v1533, %v2215
    %v2217 = vrot.slane %v1124, %v2216
    %v2218 = vsel %vm1538, %v2217, %v2213
    %v2219 = vlaneseq
    %v2220 = vshrl.u32 %v2219, 7
    %v2221 = vsub.s32 %v1540, %v2220
    %v2222 = vrot.slane %v1125, %v2221
    %v2223 = vsel %vm1545, %v2222, %v2218
    %v2224 = vlaneseq
    %v2225 = vshrl.u32 %v2224, 7
    %v2226 = vsub.s32 %v1547, %v2225
    %v2227 = vrot.slane %v1126, %v2226
    %v2228 = vsel %vm1552, %v2227, %v2223
    %v2229 = vlaneseq
    %v2230 = vshrl.u32 %v2229, 7
    %v2231 = vsub.s32 %v1554, %v2230
    %v2232 = vrot.slane %v1127, %v2231
    %v2233 = vsel %vm1559, %v2232, %v2228
    %v2234 = vlaneseq
    %v2235 = vshrl.u32 %v2234, 7
    %v2236 = vsub.s32 %v1561, %v2235
    %v2237 = vrot.slane %v1128, %v2236
    %v2238 = vsel %vm1566, %v2237, %v2233
    %v2239 = vlaneseq
    %v2240 = vshrl.u32 %v2239, 7
    %v2241 = vsub.s32 %v1458, %v2240
    %v2242 = vrot.slane %v1129, %v2241
    %v2243 = vlaneseq
    %v2244 = vshrl.u32 %v2243, 7
    %v2245 = vsub.s32 %v1463, %v2244
    %v2246 = vrot.slane %v1130, %v2245
    %v2247 = vsel %vm1468, %v2246, %v2242
    %v2248 = vlaneseq
    %v2249 = vshrl.u32 %v2248, 7
    %v2250 = vsub.s32 %v1470, %v2249
    %v2251 = vrot.slane %v1131, %v2250
    %v2252 = vsel %vm1475, %v2251, %v2247
    %v2253 = vlaneseq
    %v2254 = vshrl.u32 %v2253, 7
    %v2255 = vsub.s32 %v1477, %v2254
    %v2256 = vrot.slane %v1132, %v2255
    %v2257 = vsel %vm1482, %v2256, %v2252
    %v2258 = vlaneseq
    %v2259 = vshrl.u32 %v2258, 7
    %v2260 = vsub.s32 %v1484, %v2259
    %v2261 = vrot.slane %v1133, %v2260
    %v2262 = vsel %vm1489, %v2261, %v2257
    %v2263 = vlaneseq
    %v2264 = vshrl.u32 %v2263, 7
    %v2265 = vsub.s32 %v1491, %v2264
    %v2266 = vrot.slane %v1134, %v2265
    %v2267 = vsel %vm1496, %v2266, %v2262
    %v2268 = vlaneseq
    %v2269 = vshrl.u32 %v2268, 7
    %v2270 = vsub.s32 %v1498, %v2269
    %v2271 = vrot.slane %v1135, %v2270
    %v2272 = vsel %vm1503, %v2271, %v2267
    %v2273 = vlaneseq
    %v2274 = vshrl.u32 %v2273, 7
    %v2275 = vsub.s32 %v1505, %v2274
    %v2276 = vrot.slane %v1136, %v2275
    %v2277 = vsel %vm1510, %v2276, %v2272
    %v2278 = vlaneseq
    %v2279 = vshrl.u32 %v2278, 7
    %v2280 = vsub.s32 %v1512, %v2279
    %v2281 = vrot.slane %v1137, %v2280
    %v2282 = vsel %vm1517, %v2281, %v2277
    %v2283 = vlaneseq
    %v2284 = vshrl.u32 %v2283, 7
    %v2285 = vsub.s32 %v1519, %v2284
    %v2286 = vrot.slane %v1138, %v2285
    %v2287 = vsel %vm1524, %v2286, %v2282
    %v2288 = vlaneseq
    %v2289 = vshrl.u32 %v2288, 7
    %v2290 = vsub.s32 %v1526, %v2289
    %v2291 = vrot.slane %v1139, %v2290
    %v2292 = vsel %vm1531, %v2291, %v2287
    %v2293 = vlaneseq
    %v2294 = vshrl.u32 %v2293, 7
    %v2295 = vsub.s32 %v1533, %v2294
    %v2296 = vrot.slane %v1140, %v2295
    %v2297 = vsel %vm1538, %v2296, %v2292
    %v2298 = vlaneseq
    %v2299 = vshrl.u32 %v2298, 7
    %v2300 = vsub.s32 %v1540, %v2299
    %v2301 = vrot.slane %v1141, %v2300
    %v2302 = vsel %vm1545, %v2301, %v2297
    %v2303 = vlaneseq
    %v2304 = vshrl.u32 %v2303, 7
    %v2305 = vsub.s32 %v1547, %v2304
    %v2306 = vrot.slane %v1142, %v2305
    %v2307 = vsel %vm1552, %v2306, %v2302
    %v2308 = vlaneseq
    %v2309 = vshrl.u32 %v2308, 7
    %v2310 = vsub.s32 %v1554, %v2309
    %v2311 = vrot.slane %v1143, %v2310
    %v2312 = vsel %vm1559, %v2311, %v2307
    %v2313 = vlaneseq
    %v2314 = vshrl.u32 %v2313, 7
    %v2315 = vsub.s32 %v1561, %v2314
    %v2316 = vrot.slane %v1144, %v2315
    %v2317 = vsel %vm1566, %v2316, %v2312
    %v2318 = vlaneseq
    %v2319 = vshrl.u32 %v2318, 7
    %v2320 = vsub.s32 %v1458, %v2319
    %v2321 = vrot.slane %v1145, %v2320
    %v2322 = vlaneseq
    %v2323 = vshrl.u32 %v2322, 7
    %v2324 = vsub.s32 %v1463, %v2323
    %v2325 = vrot.slane %v1146, %v2324
    %v2326 = vsel %vm1468, %v2325, %v2321
    %v2327 = vlaneseq
    %v2328 = vshrl.u32 %v2327, 7
    %v2329 = vsub.s32 %v1470, %v2328
    %v2330 = vrot.slane %v1147, %v2329
    %v2331 = vsel %vm1475, %v2330, %v2326
    %v2332 = vlaneseq
    %v2333 = vshrl.u32 %v2332, 7
    %v2334 = vsub.s32 %v1477, %v2333
    %v2335 = vrot.slane %v1148, %v2334
    %v2336 = vsel %vm1482, %v2335, %v2331
    %v2337 = vlaneseq
    %v2338 = vshrl.u32 %v2337, 7
    %v2339 = vsub.s32 %v1484, %v2338
    %v2340 = vrot.slane %v1149, %v2339
    %v2341 = vsel %vm1489, %v2340, %v2336
    %v2342 = vlaneseq
    %v2343 = vshrl.u32 %v2342, 7
    %v2344 = vsub.s32 %v1491, %v2343
    %v2345 = vrot.slane %v1150, %v2344
    %v2346 = vsel %vm1496, %v2345, %v2341
    %v2347 = vlaneseq
    %v2348 = vshrl.u32 %v2347, 7
    %v2349 = vsub.s32 %v1498, %v2348
    %v2350 = vrot.slane %v1151, %v2349
    %v2351 = vsel %vm1503, %v2350, %v2346
    %v2352 = vlaneseq
    %v2353 = vshrl.u32 %v2352, 7
    %v2354 = vsub.s32 %v1505, %v2353
    %v2355 = vrot.slane %v1152, %v2354
    %v2356 = vsel %vm1510, %v2355, %v2351
    %v2357 = vlaneseq
    %v2358 = vshrl.u32 %v2357, 7
    %v2359 = vsub.s32 %v1512, %v2358
    %v2360 = vrot.slane %v1153, %v2359
    %v2361 = vsel %vm1517, %v2360, %v2356
    %v2362 = vlaneseq
    %v2363 = vshrl.u32 %v2362, 7
    %v2364 = vsub.s32 %v1519, %v2363
    %v2365 = vrot.slane %v1154, %v2364
    %v2366 = vsel %vm1524, %v2365, %v2361
    %v2367 = vlaneseq
    %v2368 = vshrl.u32 %v2367, 7
    %v2369 = vsub.s32 %v1526, %v2368
    %v2370 = vrot.slane %v1155, %v2369
    %v2371 = vsel %vm1531, %v2370, %v2366
    %v2372 = vlaneseq
    %v2373 = vshrl.u32 %v2372, 7
    %v2374 = vsub.s32 %v1533, %v2373
    %v2375 = vrot.slane %v1156, %v2374
    %v2376 = vsel %vm1538, %v2375, %v2371
    %v2377 = vlaneseq
    %v2378 = vshrl.u32 %v2377, 7
    %v2379 = vsub.s32 %v1540, %v2378
    %v2380 = vrot.slane %v1157, %v2379
    %v2381 = vsel %vm1545, %v2380, %v2376
    %v2382 = vlaneseq
    %v2383 = vshrl.u32 %v2382, 7
    %v2384 = vsub.s32 %v1547, %v2383
    %v2385 = vrot.slane %v1158, %v2384
    %v2386 = vsel %vm1552, %v2385, %v2381
    %v2387 = vlaneseq
    %v2388 = vshrl.u32 %v2387, 7
    %v2389 = vsub.s32 %v1554, %v2388
    %v2390 = vrot.slane %v1159, %v2389
    %v2391 = vsel %vm1559, %v2390, %v2386
    %v2392 = vlaneseq
    %v2393 = vshrl.u32 %v2392, 7
    %v2394 = vsub.s32 %v1561, %v2393
    %v2395 = vrot.slane %v1160, %v2394
    %v2396 = vsel %vm1566, %v2395, %v2391
    %v2397 = vlaneseq
    %v2398 = vshrl.u32 %v2397, 7
    %v2399 = vsub.s32 %v1458, %v2398
    %v2400 = vrot.slane %v1161, %v2399
    %v2401 = vlaneseq
    %v2402 = vshrl.u32 %v2401, 7
    %v2403 = vsub.s32 %v1463, %v2402
    %v2404 = vrot.slane %v1162, %v2403
    %v2405 = vsel %vm1468, %v2404, %v2400
    %v2406 = vlaneseq
    %v2407 = vshrl.u32 %v2406, 7
    %v2408 = vsub.s32 %v1470, %v2407
    %v2409 = vrot.slane %v1163, %v2408
    %v2410 = vsel %vm1475, %v2409, %v2405
    %v2411 = vlaneseq
    %v2412 = vshrl.u32 %v2411, 7
    %v2413 = vsub.s32 %v1477, %v2412
    %v2414 = vrot.slane %v1164, %v2413
    %v2415 = vsel %vm1482, %v2414, %v2410
    %v2416 = vlaneseq
    %v2417 = vshrl.u32 %v2416, 7
    %v2418 = vsub.s32 %v1484, %v2417
    %v2419 = vrot.slane %v1165, %v2418
    %v2420 = vsel %vm1489, %v2419, %v2415
    %v2421 = vlaneseq
    %v2422 = vshrl.u32 %v2421, 7
    %v2423 = vsub.s32 %v1491, %v2422
    %v2424 = vrot.slane %v1166, %v2423
    %v2425 = vsel %vm1496, %v2424, %v2420
    %v2426 = vlaneseq
    %v2427 = vshrl.u32 %v2426, 7
    %v2428 = vsub.s32 %v1498, %v2427
    %v2429 = vrot.slane %v1167, %v2428
    %v2430 = vsel %vm1503, %v2429, %v2425
    %v2431 = vlaneseq
    %v2432 = vshrl.u32 %v2431, 7
    %v2433 = vsub.s32 %v1505, %v2432
    %v2434 = vrot.slane %v1168, %v2433
    %v2435 = vsel %vm1510, %v2434, %v2430
    %v2436 = vlaneseq
    %v2437 = vshrl.u32 %v2436, 7
    %v2438 = vsub.s32 %v1512, %v2437
    %v2439 = vrot.slane %v1169, %v2438
    %v2440 = vsel %vm1517, %v2439, %v2435
    %v2441 = vlaneseq
    %v2442 = vshrl.u32 %v2441, 7
    %v2443 = vsub.s32 %v1519, %v2442
    %v2444 = vrot.slane %v1170, %v2443
    %v2445 = vsel %vm1524, %v2444, %v2440
    %v2446 = vlaneseq
    %v2447 = vshrl.u32 %v2446, 7
    %v2448 = vsub.s32 %v1526, %v2447
    %v2449 = vrot.slane %v1171, %v2448
    %v2450 = vsel %vm1531, %v2449, %v2445
    %v2451 = vlaneseq
    %v2452 = vshrl.u32 %v2451, 7
    %v2453 = vsub.s32 %v1533, %v2452
    %v2454 = vrot.slane %v1172, %v2453
    %v2455 = vsel %vm1538, %v2454, %v2450
    %v2456 = vlaneseq
    %v2457 = vshrl.u32 %v2456, 7
    %v2458 = vsub.s32 %v1540, %v2457
    %v2459 = vrot.slane %v1173, %v2458
    %v2460 = vsel %vm1545, %v2459, %v2455
    %v2461 = vlaneseq
    %v2462 = vshrl.u32 %v2461, 7
    %v2463 = vsub.s32 %v1547, %v2462
    %v2464 = vrot.slane %v1174, %v2463
    %v2465 = vsel %vm1552, %v2464, %v2460
    %v2466 = vlaneseq
    %v2467 = vshrl.u32 %v2466, 7
    %v2468 = vsub.s32 %v1554, %v2467
    %v2469 = vrot.slane %v1175, %v2468
    %v2470 = vsel %vm1559, %v2469, %v2465
    %v2471 = vlaneseq
    %v2472 = vshrl.u32 %v2471, 7
    %v2473 = vsub.s32 %v1561, %v2472
    %v2474 = vrot.slane %v1176, %v2473
    %v2475 = vsel %vm1566, %v2474, %v2470
    %v2476 = vlaneseq
    %v2477 = vshrl.u32 %v2476, 7
    %v2478 = vsub.s32 %v1458, %v2477
    %v2479 = vrot.slane %v1177, %v2478
    %v2480 = vlaneseq
    %v2481 = vshrl.u32 %v2480, 7
    %v2482 = vsub.s32 %v1463, %v2481
    %v2483 = vrot.slane %v1178, %v2482
    %v2484 = vsel %vm1468, %v2483, %v2479
    %v2485 = vlaneseq
    %v2486 = vshrl.u32 %v2485, 7
    %v2487 = vsub.s32 %v1470, %v2486
    %v2488 = vrot.slane %v1179, %v2487
    %v2489 = vsel %vm1475, %v2488, %v2484
    %v2490 = vlaneseq
    %v2491 = vshrl.u32 %v2490, 7
    %v2492 = vsub.s32 %v1477, %v2491
    %v2493 = vrot.slane %v1180, %v2492
    %v2494 = vsel %vm1482, %v2493, %v2489
    %v2495 = vlaneseq
    %v2496 = vshrl.u32 %v2495, 7
    %v2497 = vsub.s32 %v1484, %v2496
    %v2498 = vrot.slane %v1181, %v2497
    %v2499 = vsel %vm1489, %v2498, %v2494
    %v2500 = vlaneseq
    %v2501 = vshrl.u32 %v2500, 7
    %v2502 = vsub.s32 %v1491, %v2501
    %v2503 = vrot.slane %v1182, %v2502
    %v2504 = vsel %vm1496, %v2503, %v2499
    %v2505 = vlaneseq
    %v2506 = vshrl.u32 %v2505, 7
    %v2507 = vsub.s32 %v1498, %v2506
    %v2508 = vrot.slane %v1183, %v2507
    %v2509 = vsel %vm1503, %v2508, %v2504
    %v2510 = vlaneseq
    %v2511 = vshrl.u32 %v2510, 7
    %v2512 = vsub.s32 %v1505, %v2511
    %v2513 = vrot.slane %v1184, %v2512
    %v2514 = vsel %vm1510, %v2513, %v2509
    %v2515 = vlaneseq
    %v2516 = vshrl.u32 %v2515, 7
    %v2517 = vsub.s32 %v1512, %v2516
    %v2518 = vrot.slane %v1185, %v2517
    %v2519 = vsel %vm1517, %v2518, %v2514
    %v2520 = vlaneseq
    %v2521 = vshrl.u32 %v2520, 7
    %v2522 = vsub.s32 %v1519, %v2521
    %v2523 = vrot.slane %v1186, %v2522
    %v2524 = vsel %vm1524, %v2523, %v2519
    %v2525 = vlaneseq
    %v2526 = vshrl.u32 %v2525, 7
    %v2527 = vsub.s32 %v1526, %v2526
    %v2528 = vrot.slane %v1187, %v2527
    %v2529 = vsel %vm1531, %v2528, %v2524
    %v2530 = vlaneseq
    %v2531 = vshrl.u32 %v2530, 7
    %v2532 = vsub.s32 %v1533, %v2531
    %v2533 = vrot.slane %v1188, %v2532
    %v2534 = vsel %vm1538, %v2533, %v2529
    %v2535 = vlaneseq
    %v2536 = vshrl.u32 %v2535, 7
    %v2537 = vsub.s32 %v1540, %v2536
    %v2538 = vrot.slane %v1189, %v2537
    %v2539 = vsel %vm1545, %v2538, %v2534
    %v2540 = vlaneseq
    %v2541 = vshrl.u32 %v2540, 7
    %v2542 = vsub.s32 %v1547, %v2541
    %v2543 = vrot.slane %v1190, %v2542
    %v2544 = vsel %vm1552, %v2543, %v2539
    %v2545 = vlaneseq
    %v2546 = vshrl.u32 %v2545, 7
    %v2547 = vsub.s32 %v1554, %v2546
    %v2548 = vrot.slane %v1191, %v2547
    %v2549 = vsel %vm1559, %v2548, %v2544
    %v2550 = vlaneseq
    %v2551 = vshrl.u32 %v2550, 7
    %v2552 = vsub.s32 %v1561, %v2551
    %v2553 = vrot.slane %v1192, %v2552
    %v2554 = vsel %vm1566, %v2553, %v2549
    %v2555 = vlaneseq
    %v2556 = vshrl.u32 %v2555, 7
    %v2557 = vsub.s32 %v1458, %v2556
    %v2558 = vrot.slane %v1193, %v2557
    %v2559 = vlaneseq
    %v2560 = vshrl.u32 %v2559, 7
    %v2561 = vsub.s32 %v1463, %v2560
    %v2562 = vrot.slane %v1194, %v2561
    %v2563 = vsel %vm1468, %v2562, %v2558
    %v2564 = vlaneseq
    %v2565 = vshrl.u32 %v2564, 7
    %v2566 = vsub.s32 %v1470, %v2565
    %v2567 = vrot.slane %v1195, %v2566
    %v2568 = vsel %vm1475, %v2567, %v2563
    %v2569 = vlaneseq
    %v2570 = vshrl.u32 %v2569, 7
    %v2571 = vsub.s32 %v1477, %v2570
    %v2572 = vrot.slane %v1196, %v2571
    %v2573 = vsel %vm1482, %v2572, %v2568
    %v2574 = vlaneseq
    %v2575 = vshrl.u32 %v2574, 7
    %v2576 = vsub.s32 %v1484, %v2575
    %v2577 = vrot.slane %v1197, %v2576
    %v2578 = vsel %vm1489, %v2577, %v2573
    %v2579 = vlaneseq
    %v2580 = vshrl.u32 %v2579, 7
    %v2581 = vsub.s32 %v1491, %v2580
    %v2582 = vrot.slane %v1198, %v2581
    %v2583 = vsel %vm1496, %v2582, %v2578
    %v2584 = vlaneseq
    %v2585 = vshrl.u32 %v2584, 7
    %v2586 = vsub.s32 %v1498, %v2585
    %v2587 = vrot.slane %v1199, %v2586
    %v2588 = vsel %vm1503, %v2587, %v2583
    %v2589 = vlaneseq
    %v2590 = vshrl.u32 %v2589, 7
    %v2591 = vsub.s32 %v1505, %v2590
    %v2592 = vrot.slane %v1200, %v2591
    %v2593 = vsel %vm1510, %v2592, %v2588
    %v2594 = vlaneseq
    %v2595 = vshrl.u32 %v2594, 7
    %v2596 = vsub.s32 %v1512, %v2595
    %v2597 = vrot.slane %v1201, %v2596
    %v2598 = vsel %vm1517, %v2597, %v2593
    %v2599 = vlaneseq
    %v2600 = vshrl.u32 %v2599, 7
    %v2601 = vsub.s32 %v1519, %v2600
    %v2602 = vrot.slane %v1202, %v2601
    %v2603 = vsel %vm1524, %v2602, %v2598
    %v2604 = vlaneseq
    %v2605 = vshrl.u32 %v2604, 7
    %v2606 = vsub.s32 %v1526, %v2605
    %v2607 = vrot.slane %v1203, %v2606
    %v2608 = vsel %vm1531, %v2607, %v2603
    %v2609 = vlaneseq
    %v2610 = vshrl.u32 %v2609, 7
    %v2611 = vsub.s32 %v1533, %v2610
    %v2612 = vrot.slane %v1204, %v2611
    %v2613 = vsel %vm1538, %v2612, %v2608
    %v2614 = vlaneseq
    %v2615 = vshrl.u32 %v2614, 7
    %v2616 = vsub.s32 %v1540, %v2615
    %v2617 = vrot.slane %v1205, %v2616
    %v2618 = vsel %vm1545, %v2617, %v2613
    %v2619 = vlaneseq
    %v2620 = vshrl.u32 %v2619, 7
    %v2621 = vsub.s32 %v1547, %v2620
    %v2622 = vrot.slane %v1206, %v2621
    %v2623 = vsel %vm1552, %v2622, %v2618
    %v2624 = vlaneseq
    %v2625 = vshrl.u32 %v2624, 7
    %v2626 = vsub.s32 %v1554, %v2625
    %v2627 = vrot.slane %v1207, %v2626
    %v2628 = vsel %vm1559, %v2627, %v2623
    %v2629 = vlaneseq
    %v2630 = vshrl.u32 %v2629, 7
    %v2631 = vsub.s32 %v1561, %v2630
    %v2632 = vrot.slane %v1208, %v2631
    %v2633 = vsel %vm1566, %v2632, %v2628
    %v2634 = vlaneseq
    %v2635 = vshrl.u32 %v2634, 7
    %v2636 = vsub.s32 %v1458, %v2635
    %v2637 = vrot.slane %v1209, %v2636
    %v2638 = vlaneseq
    %v2639 = vshrl.u32 %v2638, 7
    %v2640 = vsub.s32 %v1463, %v2639
    %v2641 = vrot.slane %v1210, %v2640
    %v2642 = vsel %vm1468, %v2641, %v2637
    %v2643 = vlaneseq
    %v2644 = vshrl.u32 %v2643, 7
    %v2645 = vsub.s32 %v1470, %v2644
    %v2646 = vrot.slane %v1211, %v2645
    %v2647 = vsel %vm1475, %v2646, %v2642
    %v2648 = vlaneseq
    %v2649 = vshrl.u32 %v2648, 7
    %v2650 = vsub.s32 %v1477, %v2649
    %v2651 = vrot.slane %v1212, %v2650
    %v2652 = vsel %vm1482, %v2651, %v2647
    %v2653 = vlaneseq
    %v2654 = vshrl.u32 %v2653, 7
    %v2655 = vsub.s32 %v1484, %v2654
    %v2656 = vrot.slane %v1213, %v2655
    %v2657 = vsel %vm1489, %v2656, %v2652
    %v2658 = vlaneseq
    %v2659 = vshrl.u32 %v2658, 7
    %v2660 = vsub.s32 %v1491, %v2659
    %v2661 = vrot.slane %v1214, %v2660
    %v2662 = vsel %vm1496, %v2661, %v2657
    %v2663 = vlaneseq
    %v2664 = vshrl.u32 %v2663, 7
    %v2665 = vsub.s32 %v1498, %v2664
    %v2666 = vrot.slane %v1215, %v2665
    %v2667 = vsel %vm1503, %v2666, %v2662
    %v2668 = vlaneseq
    %v2669 = vshrl.u32 %v2668, 7
    %v2670 = vsub.s32 %v1505, %v2669
    %v2671 = vrot.slane %v1216, %v2670
    %v2672 = vsel %vm1510, %v2671, %v2667
    %vm2673 = vcmask 1041409
    %v2674 = vsel %vm2673, %v2159, %v1567
    %v2675 = vsel %vm2673, %v2238, %v1646
    %v2676 = vsel %vm2673, %v2317, %v1725
    %v2677 = vsel %vm2673, %v2396, %v1804
    %v2678 = vsel %vm2673, %v2475, %v1883
    %v2679 = vsel %vm2673, %v2554, %v1962
    %v2680 = vsel %vm2673, %v2633, %v2041
    %v2681 = vsel %vm2673, %v2672, %v2080
    %v2693 = vcombine.high %v12, %v12
    %v2694 = vcombine.high %v13, %v13
    %v2695 = vcombine.high %v14, %v14
    %v2696 = vcombine.high %v15, %v15
    %v2700 = vsel %vm256, %v2681, 0
    %v2702 = vsel %vm256, %v2696, 0
    %2704 = vmatprep.subr.mxu0 %v2693
    %2705 = vmatpush1.xpose.msra.mxu0 %v12
    %2706 = vmatprep.subr.mxu0 0.0
    %2707 = vmatpush1.xpose.msra.mxu0 0.0
    %2708 = vmatprep.subr.mxu0 0.0
    %2709 = vmatpush1.xpose.msra.mxu0 0.0
    %2710 = vmatprep.subr.mxu0 0.0
    %2711 = vmatpush1.xpose.msra.mxu0 0.0
    %2712 = vmatprep.subr.mxu0 0.0
    %2713 = vmatpush1.xpose.msra.mxu0 0.0
    %2714 = vmatprep.subr.mxu0 0.0
    %2715 = vmatpush1.xpose.msra.mxu0 0.0
    %2716 = vmatprep.subr.mxu0 0.0
    %2717 = vmatpush1.xpose.msra.mxu0 0.0
    %2718 = vmatprep.subr.mxu0 0.0
    %2719 = vmatpush1.xpose.msra.mxu0 0.0
    %2720 = vmatprep.subr.mxu0 0.0
    %2721 = vmatpush1.xpose.msra.mxu0 0.0
    %2722 = vmatprep.subr.mxu0 0.0
    %2723 = vmatpush1.xpose.msra.mxu0 0.0
    %2724 = vmatprep.subr.mxu0 0.0
    %2725 = vmatpush1.xpose.msra.mxu0 0.0
    %2726 = vmatprep.subr.mxu0 0.0
    %2727 = vmatpush1.xpose.msra.mxu0 0.0
    %2728 = vmatprep.subr.mxu0 0.0
    %2729 = vmatpush1.xpose.msra.mxu0 0.0
    %2730 = vmatprep.subr.mxu0 0.0
    %2731 = vmatpush1.xpose.msra.mxu0 0.0
    %2732 = vmatprep.subr.mxu0 0.0
    %2733 = vmatpush1.xpose.msra.mxu0 0.0
    %2734 = vmatprep.subr.mxu0 0.0
    %2735 = vmatpush1.xpose.msra.mxu0 0.0
    %2736 = vmatprep.subr.mxu0 0.0
    %2737 = vmatpush1.xpose.msra.mxu0 0.0
    %2738 = vmatprep.subr.mxu0 0.0
    %2739 = vmatpush1.xpose.msra.mxu0 0.0
    %2740 = vmatprep.subr.mxu0 0.0
    %2741 = vmatpush1.xpose.msra.mxu0 0.0
    %2742 = vmatprep.subr.mxu0 0.0
    %2743 = vmatpush1.xpose.msra.mxu0 0.0
    %2744 = vmatprep.subr.mxu0 0.0
    %2745 = vmatpush1.xpose.msra.mxu0 0.0
    %2746 = vmatprep.subr.mxu0 0.0
    %2747 = vmatpush1.xpose.msra.mxu0 0.0
    %2748 = vmatprep.subr.mxu0 0.0
    %2749 = vmatpush1.xpose.msra.mxu0 0.0
    %2750 = vmatprep.subr.mxu0 0.0
    %2751 = vmatpush1.xpose.msra.mxu0 0.0
    %2752 = vmatprep.subr.mxu0 0.0
    %2753 = vmatpush1.xpose.msra.mxu0 0.0
    %2754 = vmatprep.subr.mxu0 0.0
    %2755 = vmatpush1.xpose.msra.mxu0 0.0
    %2756 = vmatprep.subr.mxu0 0.0
    %2757 = vmatpush1.xpose.msra.mxu0 0.0
    %2758 = vmatprep.subr.mxu0 0.0
    %2759 = vmatpush1.xpose.msra.mxu0 0.0
    %2760 = vmatprep.subr.mxu0 0.0
    %2761 = vmatpush1.xpose.msra.mxu0 0.0
    %2762 = vmatprep.subr.mxu0 0.0
    %2763 = vmatpush1.xpose.msra.mxu0 0.0
    %2764 = vmatprep.subr.mxu0 0.0
    %2765 = vmatpush1.xpose.msra.mxu0 0.0
    %2766 = vmatprep.subr.mxu0 0.0
    %2767 = vmatpush1.xpose.msra.mxu0 0.0
    %2768 = vmatprep.mubr.f32.mxu0 %v2675
    %2769 = vmatmul.mubr.f32.gmra.mrb[0].mxu0 %v2674
    %v2770 = vpop.f32.mrb[0].mxu0
    %v2771 = vadd.f32 0.0, %v2770
    %v2772 = vpop.f32.mrb[0].mxu0
    %2773 = vdwg.mxu0
    %2774 = vmatprep.subr.mxu0 %v2694
    %2775 = vmatpush1.xpose.msra.mxu0 %v13
    %2776 = vmatprep.subr.mxu0 0.0
    %2777 = vmatpush1.xpose.msra.mxu0 0.0
    %2778 = vmatprep.subr.mxu0 0.0
    %2779 = vmatpush1.xpose.msra.mxu0 0.0
    %2780 = vmatprep.subr.mxu0 0.0
    %2781 = vmatpush1.xpose.msra.mxu0 0.0
    %2782 = vmatprep.subr.mxu0 0.0
    %2783 = vmatpush1.xpose.msra.mxu0 0.0
    %2784 = vmatprep.subr.mxu0 0.0
    %2785 = vmatpush1.xpose.msra.mxu0 0.0
    %2786 = vmatprep.subr.mxu0 0.0
    %2787 = vmatpush1.xpose.msra.mxu0 0.0
    %2788 = vmatprep.subr.mxu0 0.0
    %2789 = vmatpush1.xpose.msra.mxu0 0.0
    %2790 = vmatprep.subr.mxu0 0.0
    %2791 = vmatpush1.xpose.msra.mxu0 0.0
    %2792 = vmatprep.subr.mxu0 0.0
    %2793 = vmatpush1.xpose.msra.mxu0 0.0
    %2794 = vmatprep.subr.mxu0 0.0
    %2795 = vmatpush1.xpose.msra.mxu0 0.0
    %2796 = vmatprep.subr.mxu0 0.0
    %2797 = vmatpush1.xpose.msra.mxu0 0.0
    %2798 = vmatprep.subr.mxu0 0.0
    %2799 = vmatpush1.xpose.msra.mxu0 0.0
    %2800 = vmatprep.subr.mxu0 0.0
    %2801 = vmatpush1.xpose.msra.mxu0 0.0
    %2802 = vmatprep.subr.mxu0 0.0
    %2803 = vmatpush1.xpose.msra.mxu0 0.0
    %2804 = vmatprep.subr.mxu0 0.0
    %2805 = vmatpush1.xpose.msra.mxu0 0.0
    %2806 = vmatprep.subr.mxu0 0.0
    %2807 = vmatpush1.xpose.msra.mxu0 0.0
    %2808 = vmatprep.subr.mxu0 0.0
    %2809 = vmatpush1.xpose.msra.mxu0 0.0
    %2810 = vmatprep.subr.mxu0 0.0
    %2811 = vmatpush1.xpose.msra.mxu0 0.0
    %2812 = vmatprep.subr.mxu0 0.0
    %2813 = vmatpush1.xpose.msra.mxu0 0.0
    %2814 = vmatprep.subr.mxu0 0.0
    %2815 = vmatpush1.xpose.msra.mxu0 0.0
    %2816 = vmatprep.subr.mxu0 0.0
    %2817 = vmatpush1.xpose.msra.mxu0 0.0
    %2818 = vmatprep.subr.mxu0 0.0
    %2819 = vmatpush1.xpose.msra.mxu0 0.0
    %2820 = vmatprep.subr.mxu0 0.0
    %2821 = vmatpush1.xpose.msra.mxu0 0.0
    %2822 = vmatprep.subr.mxu0 0.0
    %2823 = vmatpush1.xpose.msra.mxu0 0.0
    %2824 = vmatprep.subr.mxu0 0.0
    %2825 = vmatpush1.xpose.msra.mxu0 0.0
    %2826 = vmatprep.subr.mxu0 0.0
    %2827 = vmatpush1.xpose.msra.mxu0 0.0
    %2828 = vmatprep.subr.mxu0 0.0
    %2829 = vmatpush1.xpose.msra.mxu0 0.0
    %2830 = vmatprep.subr.mxu0 0.0
    %2831 = vmatpush1.xpose.msra.mxu0 0.0
    %2832 = vmatprep.subr.mxu0 0.0
    %2833 = vmatpush1.xpose.msra.mxu0 0.0
    %2834 = vmatprep.subr.mxu0 0.0
    %2835 = vmatpush1.xpose.msra.mxu0 0.0
    %2836 = vmatprep.subr.mxu0 0.0
    %2837 = vmatpush1.xpose.msra.mxu0 0.0
    %2838 = vmatprep.mubr.f32.mxu0 %v2677
    %2839 = vmatmul.mubr.f32.gmra.mrb[0].mxu0 %v2676
    %v2840 = vpop.f32.mrb[0].mxu0
    %v2841 = vadd.f32 %v2771, %v2840
    %v2842 = vpop.f32.mrb[0].mxu0
    %2843 = vdwg.mxu0
    %2844 = vmatprep.subr.mxu0 %v2695
    %2845 = vmatpush1.xpose.msra.mxu0 %v14
    %2846 = vmatprep.subr.mxu0 0.0
    %2847 = vmatpush1.xpose.msra.mxu0 0.0
    %2848 = vmatprep.subr.mxu0 0.0
    %2849 = vmatpush1.xpose.msra.mxu0 0.0
    %2850 = vmatprep.subr.mxu0 0.0
    %2851 = vmatpush1.xpose.msra.mxu0 0.0
    %2852 = vmatprep.subr.mxu0 0.0
    %2853 = vmatpush1.xpose.msra.mxu0 0.0
    %2854 = vmatprep.subr.mxu0 0.0
    %2855 = vmatpush1.xpose.msra.mxu0 0.0
    %2856 = vmatprep.subr.mxu0 0.0
    %2857 = vmatpush1.xpose.msra.mxu0 0.0
    %2858 = vmatprep.subr.mxu0 0.0
    %2859 = vmatpush1.xpose.msra.mxu0 0.0
    %2860 = vmatprep.subr.mxu0 0.0
    %2861 = vmatpush1.xpose.msra.mxu0 0.0
    %2862 = vmatprep.subr.mxu0 0.0
    %2863 = vmatpush1.xpose.msra.mxu0 0.0
    %2864 = vmatprep.subr.mxu0 0.0
    %2865 = vmatpush1.xpose.msra.mxu0 0.0
    %2866 = vmatprep.subr.mxu0 0.0
    %2867 = vmatpush1.xpose.msra.mxu0 0.0
    %2868 = vmatprep.subr.mxu0 0.0
    %2869 = vmatpush1.xpose.msra.mxu0 0.0
    %2870 = vmatprep.subr.mxu0 0.0
    %2871 = vmatpush1.xpose.msra.mxu0 0.0
    %2872 = vmatprep.subr.mxu0 0.0
    %2873 = vmatpush1.xpose.msra.mxu0 0.0
    %2874 = vmatprep.subr.mxu0 0.0
    %2875 = vmatpush1.xpose.msra.mxu0 0.0
    %2876 = vmatprep.subr.mxu0 0.0
    %2877 = vmatpush1.xpose.msra.mxu0 0.0
    %2878 = vmatprep.subr.mxu0 0.0
    %2879 = vmatpush1.xpose.msra.mxu0 0.0
    %2880 = vmatprep.subr.mxu0 0.0
    %2881 = vmatpush1.xpose.msra.mxu0 0.0
    %2882 = vmatprep.subr.mxu0 0.0
    %2883 = vmatpush1.xpose.msra.mxu0 0.0
    %2884 = vmatprep.subr.mxu0 0.0
    %2885 = vmatpush1.xpose.msra.mxu0 0.0
    %2886 = vmatprep.subr.mxu0 0.0
    %2887 = vmatpush1.xpose.msra.mxu0 0.0
    %2888 = vmatprep.subr.mxu0 0.0
    %2889 = vmatpush1.xpose.msra.mxu0 0.0
    %2890 = vmatprep.subr.mxu0 0.0
    %2891 = vmatpush1.xpose.msra.mxu0 0.0
    %2892 = vmatprep.subr.mxu0 0.0
    %2893 = vmatpush1.xpose.msra.mxu0 0.0
    %2894 = vmatprep.subr.mxu0 0.0
    %2895 = vmatpush1.xpose.msra.mxu0 0.0
    %2896 = vmatprep.subr.mxu0 0.0
    %2897 = vmatpush1.xpose.msra.mxu0 0.0
    %2898 = vmatprep.subr.mxu0 0.0
    %2899 = vmatpush1.xpose.msra.mxu0 0.0
    %2900 = vmatprep.subr.mxu0 0.0
    %2901 = vmatpush1.xpose.msra.mxu0 0.0
    %2902 = vmatprep.subr.mxu0 0.0
    %2903 = vmatpush1.xpose.msra.mxu0 0.0
    %2904 = vmatprep.subr.mxu0 0.0
    %2905 = vmatpush1.xpose.msra.mxu0 0.0
    %2906 = vmatprep.subr.mxu0 0.0
    %2907 = vmatpush1.xpose.msra.mxu0 0.0
    %2908 = vmatprep.mubr.f32.mxu0 %v2679
    %2909 = vmatmul.mubr.f32.gmra.mrb[0].mxu0 %v2678
    %v2910 = vpop.f32.mrb[0].mxu0
    %v2911 = vadd.f32 %v2841, %v2910
    %v2912 = vpop.f32.mrb[0].mxu0
    %2913 = vdwg.mxu0
    %2914 = vmatprep.subr.mxu0 %v2702
    %2915 = vmatpush1.xpose.msra.mxu0 %v15
    %2916 = vmatprep.subr.mxu0 0.0
    %2917 = vmatpush1.xpose.msra.mxu0 0.0
    %2918 = vmatprep.subr.mxu0 0.0
    %2919 = vmatpush1.xpose.msra.mxu0 0.0
    %2920 = vmatprep.subr.mxu0 0.0
    %2921 = vmatpush1.xpose.msra.mxu0 0.0
    %2922 = vmatprep.subr.mxu0 0.0
    %2923 = vmatpush1.xpose.msra.mxu0 0.0
    %2924 = vmatprep.subr.mxu0 0.0
    %2925 = vmatpush1.xpose.msra.mxu0 0.0
    %2926 = vmatprep.subr.mxu0 0.0
    %2927 = vmatpush1.xpose.msra.mxu0 0.0
    %2928 = vmatprep.subr.mxu0 0.0
    %2929 = vmatpush1.xpose.msra.mxu0 0.0
    %2930 = vmatprep.subr.mxu0 0.0
    %2931 = vmatpush1.xpose.msra.mxu0 0.0
    %2932 = vmatprep.subr.mxu0 0.0
    %2933 = vmatpush1.xpose.msra.mxu0 0.0
    %2934 = vmatprep.subr.mxu0 0.0
    %2935 = vmatpush1.xpose.msra.mxu0 0.0
    %2936 = vmatprep.subr.mxu0 0.0
    %2937 = vmatpush1.xpose.msra.mxu0 0.0
    %2938 = vmatprep.subr.mxu0 0.0
    %2939 = vmatpush1.xpose.msra.mxu0 0.0
    %2940 = vmatprep.subr.mxu0 0.0
    %2941 = vmatpush1.xpose.msra.mxu0 0.0
    %2942 = vmatprep.subr.mxu0 0.0
    %2943 = vmatpush1.xpose.msra.mxu0 0.0
    %2944 = vmatprep.subr.mxu0 0.0
    %2945 = vmatpush1.xpose.msra.mxu0 0.0
    %2946 = vmatprep.subr.mxu0 0.0
    %2947 = vmatpush1.xpose.msra.mxu0 0.0
    %2948 = vmatprep.subr.mxu0 0.0
    %2949 = vmatpush1.xpose.msra.mxu0 0.0
    %2950 = vmatprep.subr.mxu0 0.0
    %2951 = vmatpush1.xpose.msra.mxu0 0.0
    %2952 = vmatprep.subr.mxu0 0.0
    %2953 = vmatpush1.xpose.msra.mxu0 0.0
    %2954 = vmatprep.subr.mxu0 0.0
    %2955 = vmatpush1.xpose.msra.mxu0 0.0
    %2956 = vmatprep.subr.mxu0 0.0
    %2957 = vmatpush1.xpose.msra.mxu0 0.0
    %2958 = vmatprep.subr.mxu0 0.0
    %2959 = vmatpush1.xpose.msra.mxu0 0.0
    %2960 = vmatprep.subr.mxu0 0.0
    %2961 = vmatpush1.xpose.msra.mxu0 0.0
    %2962 = vmatprep.subr.mxu0 0.0
    %2963 = vmatpush1.xpose.msra.mxu0 0.0
    %2964 = vmatprep.subr.mxu0 0.0
    %2965 = vmatpush1.xpose.msra.mxu0 0.0
    %2966 = vmatprep.subr.mxu0 0.0
    %2967 = vmatpush1.xpose.msra.mxu0 0.0
    %2968 = vmatprep.subr.mxu0 0.0
    %2969 = vmatpush1.xpose.msra.mxu0 0.0
    %2970 = vmatprep.subr.mxu0 0.0
    %2971 = vmatpush1.xpose.msra.mxu0 0.0
    %2972 = vmatprep.subr.mxu0 0.0
    %2973 = vmatpush1.xpose.msra.mxu0 0.0
    %2974 = vmatprep.subr.mxu0 0.0
    %2975 = vmatpush1.xpose.msra.mxu0 0.0
    %2976 = vmatprep.subr.mxu0 0.0
    %2977 = vmatpush1.xpose.msra.mxu0 0.0
    %2978 = vmatprep.mubr.f32.mxu0 %v2700
    %2979 = vmatmul.mubr.f32.gmra.mrb[0].mxu0 %v2680
    %v2980 = vpop.f32.mrb[0].mxu0
    %v2981 = vadd.f32 %v2911, %v2980
    %v2982 = vpop.f32.mrb[0].mxu0
    %2983 = vdwg.mxu0
    %vm2984 = vcmask 25600
    %2985 = vst.msk [vmem:[#allocation2] sm:$0x3] %vm2984, %v2981
    // Predicated region
    $region10: #{encoder_head.1} parent=1 // pred_check
      _
    $region11: #{encoder_head.1} parent=1 // pred_check_branch
      %2987 = sbr.rel (0) target = $region13
    $region12: #{encoder_head.1} parent=1 // pred_region
      %s2989 = ssub.s32 32, 32
      %2990 = vsyncadd [#allocation3], %s2989
      %s2992 = sshll.u32 [#allocation2], 4
      %s2993 = int_to_ptr.vmem [resolvable:$true] %s2992
      %2995 = dma.vmem_to_hbm [thread:$0]  %s2993, 32, %s2, [#allocation3]
    $region13: #{encoder_head.1} parent=1 // pred_fallthru
      _
    // Predicated region
    $region14: #{encoder_head.1} parent=1 // pred_check
      _
    $region15: #{encoder_head.1} parent=1 // pred_check_branch
      %2997 = sbr.rel (0) target = $region17
    $region16: #{encoder_head.1} parent=1 // pred_region
      %2998 = dma.done [#allocation3], 32
    $region17: #{encoder_head.1} parent=1 // pred_fallthru
      _
    %2999 = vsyncpa [#allocation3], 1

</llo_original>
